<compile_context>
chip_gen: v7x
topology: tpu7x:2x2x1
jax: 0.10.0
libtpu: 0.0.40
codegen_flags: <defaults>
</compile_context>

<pallas_src>
import math

import jax
import jax.numpy as jnp
from jax import lax
from jax.experimental import pallas as pl
from jax.experimental.pallas import tpu as pltpu


def _softplus_inv(y: float) -> float:
    """Python-float softplus^-1, matching STGCN's softplus_inv (f32 eps)."""
    if y > 20.0:
        return float(y)
    eps = float(jnp.finfo(jnp.float32).eps)
    return float(y + math.log(-math.expm1(-(y + eps))))


def _round_up(x: int, m: int) -> int:
    return -(-x // m) * m


def _vmem_capacity_bytes() -> int:
    """Physical VMEM of the current chip; conservative 64 MiB (v7x) fallback."""
    try:
        info = pltpu.get_tpu_info()
        cap = getattr(info, "vmem_capacity_bytes", None)
        if cap:
            return int(cap)
    except Exception:
        pass
    return 64 * 1024 * 1024


def _pick_batch_tile(B: int, D: int, R: int, in_itemsize: int,
                     w_itemsize: int, budget: int) -> int:
    """Largest batch tile whose *padded* VMEM footprint fits `budget`.

    Accounts for lane padding (last dim -> multiple of 128), sublane padding
    (batch dim -> multiple of 8), 2 inputs x 2 pipeline buffers, both outputs
    x 2 buffers, and the resident kron weight (counted x2 conservatively).
    Also caps the tile so the grid has >= 2 steps when B allows (v7x has two
    TensorCores; a single-step grid also has no DMA/compute overlap).
    """
    if B <= 8:
        return B                      # block dim equal to full dim is legal
    lane_D = _round_up(D, 128)
    lane_R = _round_up(R, 128)
    w_bytes = 2 * _round_up(D, 8) * lane_R * w_itemsize       # resident weight
    per8 = (2 * 2 * 8 * lane_D * in_itemsize                  # eps + y, x2 bufs
            + 2 * 8 * lane_R * 4                              # m output, x2 bufs
            + 2 * 8 * 128 * 4)                                # ssq output, x2 bufs
    groups = max(1, (budget - w_bytes) // per8)
    bt = int(groups) * 8
    bt = min(bt, _round_up(-(-B // 2), 8))                    # force >= 2 steps
    return max(8, bt)


def _make_kernel(total_rows: int, bt: int, need_row_mask: bool):
    def kernel(eps_ref, y_ref, w_ref, m_ref, ssq_ref):
        eps = eps_ref[...]                                    # (bt, D) native dtype
        y = y_ref[...]
        keep = y != 0
        if need_row_mask:
            # Ragged batch tail: zero out rows beyond B instead of padding the
            # inputs in HBM (output OOB stores are masked by Pallas).
            row = lax.broadcasted_iota(jnp.int32, (bt, 1), 0) \
                + pl.program_id(0) * bt
            keep = jnp.logical_and(keep, row < total_rows)
        x = jnp.where(keep, eps, jnp.zeros_like(eps))         # masked residuals

        # Per-batch-element sum of squares (f32 accumulation).
        xf = x.astype(jnp.float32)
        ssq = jnp.sum(xf * xf, axis=1, keepdims=True)         # (bt, 1)
        ssq_ref[...] = jnp.broadcast_to(ssq, ssq_ref.shape)   # (bt, 8)

        # m_b = x_b @ kron(Lq', Ln') : one large 2D MXU matmul, f32 accumulate.
        m_ref[...] = jnp.dot(x, w_ref[...],
                             preferred_element_type=jnp.float32)
    return kernel


def mgd_loss_full_eye(eps_t, y_t, L_n, L_q, sigma, *,
                      sigma_init: float = 1.0, sigma_minimum: float = 0.001):
    """Forward pass of MGD_loss_full_eye: mean_b of -LowRankMVN.log_prob(x_b)."""
    B, Q, N = eps_t.shape
    rank_n = L_n.shape[1]
    rank_q = L_q.shape[1]
    D = Q * N
    R = rank_q * rank_n

    # Parameter-only preprocessing (XLA, tiny).
    lq = L_q.astype(jnp.float32) / math.sqrt(rank_q)            # (Q, rq)
    ln = L_n.astype(jnp.float32) / math.sqrt(rank_n)            # (N, rn)
    diag_bias = _softplus_inv(sigma_init ** 2) if sigma_init > 0.0 else 0.0
    d = jax.nn.softplus(sigma.astype(jnp.float32)[0] + diag_bias) \
        + sigma_minimum ** 2                                    # stable softplus

    # Kronecker-factored cov factor, resident in VMEM (D x R; ~3.6 MB f32 at
    # STGCN defaults).  bf16 inputs -> bf16 MXU operands, f32 accumulate.
    w = jnp.kron(lq, ln)                                        # (D, R) f32
    in_dtype = eps_t.dtype
    w_mm = w.astype(jnp.bfloat16) if in_dtype == jnp.bfloat16 else w

    # Free metadata reshape: (B, Q, N) -> (B, D) keeps the kron flattening
    # order (q*N + n) and gives the kernel fully lane-dense 2D tiles.
    eps2 = eps_t.reshape(B, D)
    y2 = y_t.reshape(B, D)

    budget = int(_vmem_capacity_bytes() * 3 // 4)
    bt = _pick_batch_tile(B, D, R, in_dtype.itemsize, w_mm.dtype.itemsize,
                          budget)
    nb = -(-B // bt)
    need_row_mask = (B % bt) != 0

    cost = pl.CostEstimate(
        flops=2 * B * D * R + 2 * B * D,
        transcendentals=0,
        bytes_accessed=(2 * B * D * in_dtype.itemsize
                        + D * R * w_mm.dtype.itemsize
                        + B * (R + 8) * 4))

    m, ssq = pl.pallas_call(
        _make_kernel(B, bt, need_row_mask),
        out_shape=(
            jax.ShapeDtypeStruct((B, R), jnp.float32),
            jax.ShapeDtypeStruct((B, 8), jnp.float32),
        ),
        grid=(nb,),
        in_specs=[
            pl.BlockSpec((bt, D), lambda i: (i, 0)),            # eps block
            pl.BlockSpec((bt, D), lambda i: (i, 0)),            # y block
            pl.BlockSpec((D, R), lambda i: (0, 0)),             # W (resident)
        ],
        out_specs=(
            pl.BlockSpec((bt, R), lambda i: (i, 0)),            # m (lane-dense)
            pl.BlockSpec((bt, 8), lambda i: (i, 0)),            # ||x||^2
        ),
        compiler_params=pltpu.CompilerParams(
            dimension_semantics=("parallel",),  # no carried state -> megacore-safe
            vmem_limit_bytes=budget,
        ),
        cost_estimate=cost,
    )(eps2, y2, w_mm)

    ssq = ssq[:, 0]                                             # (B,)

    # Parameter/R-sized combine in XLA: capacitance Cholesky, log-det, solve.
    hi = lax.Precision.HIGHEST
    aq = jnp.matmul(lq.T, lq, precision=hi)                     # Lq'^T Lq'
    an = jnp.matmul(ln.T, ln, precision=hi)                     # Ln'^T Ln'
    cap = jnp.eye(R, dtype=jnp.float32) + jnp.kron(aq, an) / d
    l_cap = jnp.linalg.cholesky(cap)
    logdet_cap = 2.0 * jnp.sum(jnp.log(jnp.diagonal(l_cap)))
    z = jax.scipy.linalg.cho_solve((l_cap, True), m.T)          # (R, B)
    quad_corr = jnp.sum(m * z.T, axis=1)                        # (B,)
    mahalanobis = ssq / d - quad_corr / (d * d)
    nll = 0.5 * (D * math.log(2.0 * math.pi) + D * jnp.log(d)
                 + logdet_cap + mahalanobis)
    return jnp.mean(nll)


def _reference(eps_t, y_t, L_n, L_q, sigma, *,
               sigma_init: float = 1.0, sigma_minimum: float = 0.001):
    """Independent dense full-covariance reference (builds Sigma explicitly)."""
    B, Q, N = eps_t.shape
    rank_n = L_n.shape[1]
    rank_q = L_q.shape[1]
    D = Q * N
    mask = (y_t != 0.0).astype(jnp.float32)
    x = (eps_t.astype(jnp.float32) * mask).reshape(B, D)
    W = jnp.kron(L_q.astype(jnp.float32) / math.sqrt(rank_q),
                 L_n.astype(jnp.float32) / math.sqrt(rank_n))   # (D, R)
    diag_bias = _softplus_inv(sigma_init ** 2) if sigma_init > 0.0 else 0.0
    d = jax.nn.softplus(sigma.astype(jnp.float32)[0] + diag_bias) \
        + sigma_minimum ** 2
    hi = lax.Precision.HIGHEST
    cov = jnp.matmul(W, W.T, precision=hi) + d * jnp.eye(D, dtype=jnp.float32)
    chol = jnp.linalg.cholesky(cov)
    logdet = 2.0 * jnp.sum(jnp.log(jnp.diagonal(chol)))
    sol = jax.scipy.linalg.cho_solve((chol, True), x.T)         # (D, B)
    quad = jnp.sum(x * sol.T, axis=1)                           # (B,)
    nll = 0.5 * (D * math.log(2.0 * math.pi) + logdet + quad)
    return jnp.mean(nll)


if __name__ == "__main__":
    key = jax.random.PRNGKey(0)
    k1, k2, k3, k4, k5, k6 = jax.random.split(key, 6)
    B, Q, N = 2, 8, 16            # batch, seq_length, num_nodes
    rank_q, rank_n = 4, 6         # small demo ranks (module defaults: 12 / 30)
    scaling = 1.0

    eps_t = jax.random.normal(k1, (B, Q, N), dtype=jnp.float32)
    y_t = jax.random.normal(k2, (B, Q, N), dtype=jnp.float32)
    zero_mask = jax.random.bernoulli(k3, p=0.3, shape=(B, Q, N))
    y_t = jnp.where(zero_mask, 0.0, y_t)      # zeros so the mask actually matters
    L_n = scaling * jax.random.normal(k4, (N, rank_n), dtype=jnp.float32)
    L_q = scaling * jax.random.normal(k5, (Q, rank_q), dtype=jnp.float32)
    sigma = jax.random.normal(k6, (1,), dtype=jnp.float32)

    loss_fn = jax.jit(mgd_loss_full_eye)
    loss = jax.block_until_ready(loss_fn(eps_t, y_t, L_n, L_q, sigma))
    ref = jax.block_until_ready(_reference(eps_t, y_t, L_n, L_q, sigma))
    assert jnp.allclose(loss, ref, rtol=2e-3, atol=2e-3), (loss, ref)
    print("KERNEL_OK")
</pallas_src>

<mosaic_0001>
module attributes {stable_mosaic.version = 11 : i64} {
  func.func @kernel(%arg0: i32, %arg1: memref<2x128xf32, #tpu.memory_space<vmem>>, %arg2: memref<2x128xf32, #tpu.memory_space<vmem>>, %arg3: memref<128x24xf32, #tpu.memory_space<vmem>>, %arg4: memref<2x24xf32, #tpu.memory_space<vmem>>, %arg5: memref<2x8xf32, #tpu.memory_space<vmem>>) attributes {dimension_semantics = [#tpu.dimension_semantics<parallel>], iteration_bounds = array<i64: 1>, scalar_prefetch = 0 : i64, scratch_operands = 0 : i64, tpu.core_type = #tpu.core_type<tc>, window_params = [{transform_indices = @transform_0, window_bounds = array<i64: 2, 128>}, {transform_indices = @transform_1, window_bounds = array<i64: 2, 128>}, {pipeline_mode = #tpu.pipeline_mode<synchronous>, transform_indices = @transform_2, window_bounds = array<i64: 128, 24>}, {transform_indices = @transform_3, window_bounds = array<i64: 2, 24>}, {transform_indices = @transform_4, window_bounds = array<i64: 2, 8>}]} {
    %c0 = arith.constant 0 : index
    %c0_0 = arith.constant 0 : index
    %0 = vector.load %arg1[%c0, %c0_0] : memref<2x128xf32, #tpu.memory_space<vmem>>, vector<2x128xf32>
    %c0_1 = arith.constant 0 : index
    %c0_2 = arith.constant 0 : index
    %1 = vector.load %arg2[%c0_1, %c0_2] : memref<2x128xf32, #tpu.memory_space<vmem>>, vector<2x128xf32>
    %cst = arith.constant 0.000000e+00 : f32
    %2 = vector.broadcast %cst : f32 to vector<2x128xf32>
    %3 = arith.cmpf one, %1, %2 : vector<2x128xf32>
    %cst_3 = arith.constant 0.000000e+00 : f32
    %4 = vector.broadcast %cst_3 : f32 to vector<2x128xf32>
    %5 = arith.select %3, %0, %4 : vector<2x128xi1>, vector<2x128xf32>
    %6 = arith.mulf %5, %5 : vector<2x128xf32>
    %cst_4 = arith.constant dense<0.000000e+00> : vector<2xf32>
    %7 = vector.multi_reduction <add>, %6, %cst_4 [1] : vector<2x128xf32> to vector<2xf32>
    %8 = vector.shape_cast %7 : vector<2xf32> to vector<2x1xf32>
    %9 = vector.shape_cast %8 : vector<2x1xf32> to vector<2x1xf32>
    %10 = vector.broadcast %9 : vector<2x1xf32> to vector<2x8xf32>
    %c0_5 = arith.constant 0 : index
    %c0_6 = arith.constant 0 : index
    %11 = vector.load %arg5[%c0_5, %c0_6] : memref<2x8xf32, #tpu.memory_space<vmem>>, vector<2x8xf32>
    tpu.vector_store %arg5[%c0_5, %c0_6], %10 {strides = array<i32>} : memref<2x8xf32, #tpu.memory_space<vmem>>, vector<2x8xf32>,
    %c0_7 = arith.constant 0 : index
    %c0_8 = arith.constant 0 : index
    %12 = vector.load %arg3[%c0_7, %c0_8] : memref<128x24xf32, #tpu.memory_space<vmem>>, vector<128x24xf32>
    %cst_9 = arith.constant dense<0.000000e+00> : vector<2x24xf32>
    %13 = tpu.matmul %5, %12, %cst_9 {dimension_numbers = #tpu.dot_dimension_numbers<[1], [0], [0], [1], [0, 0, 1, 1], [], []>} : vector<2x128xf32>, vector<128x24xf32>, vector<2x24xf32> -> vector<2x24xf32>
    %c0_10 = arith.constant 0 : index
    %c0_11 = arith.constant 0 : index
    %14 = vector.load %arg4[%c0_10, %c0_11] : memref<2x24xf32, #tpu.memory_space<vmem>>, vector<2x24xf32>
    tpu.vector_store %arg4[%c0_10, %c0_11], %13 {strides = array<i32>} : memref<2x24xf32, #tpu.memory_space<vmem>>, vector<2x24xf32>,
    return
  }
  func.func @transform_0(%arg0: i32) -> (i32, i32) {
    %c0_i32 = arith.constant 0 : i32
    %c0_i32_0 = arith.constant 0 : i32
    return %arg0, %c0_i32 : i32, i32
  }
  func.func @transform_1(%arg0: i32) -> (i32, i32) {
    %c0_i32 = arith.constant 0 : i32
    %c0_i32_0 = arith.constant 0 : i32
    return %arg0, %c0_i32 : i32, i32
  }
  func.func @transform_2(%arg0: i32) -> (i32, i32) {
    %c0_i32 = arith.constant 0 : i32
    %c0_i32_0 = arith.constant 0 : i32
    %c0_i32_1 = arith.constant 0 : i32
    return %c0_i32, %c0_i32_0 : i32, i32
  }
  func.func @transform_3(%arg0: i32) -> (i32, i32) {
    %c0_i32 = arith.constant 0 : i32
    %c0_i32_0 = arith.constant 0 : i32
    return %arg0, %c0_i32 : i32, i32
  }
  func.func @transform_4(%arg0: i32) -> (i32, i32) {
    %c0_i32 = arith.constant 0 : i32
    %c0_i32_0 = arith.constant 0 : i32
    return %arg0, %c0_i32 : i32, i32
  }
}

</mosaic_0001>

<llo_original>
// kernel: custom-call.6
$region0: #{custom-call.6}
  %s0 = inlined_call_operand.vmem [shape: f32[24,24], index: 0, kind: input, shape index: {}]
  %s1 = inlined_call_operand.vmem [shape: f32[24,24], index: 1, kind: output, shape index: {}]
  $region1: #{custom-call.6} parent=0
    #allocation0 [shape = 'u8[12288]{0}', space=vmem, size = 0x3000, scoped, tag = 'operand span for operand 0']
    #allocation1 [shape = 'u8[12288]{0}', space=vmem, size = 0x3000, scoped, tag = 'operand span for operand 1']
    // Predicated region
    $region2: #{custom-call.6} parent=1 // pred_check
      _
    $region3: #{custom-call.6} parent=1 // pred_check_branch
      %3 = sbr.rel (0) target = $region5
    $region4: #{custom-call.6} parent=1 // pred_region
      // Predicated region
      $region6: #{custom-call.6} parent=4 // pred_check
        _
      $region7: #{custom-call.6} parent=4 // pred_check_branch
        %5 = sbr.rel (0) target = $region9
      $region8: #{custom-call.6} parent=4 // pred_region
        // Predicated region
        $region21: #{custom-call.6} parent=8 // pred_check
          _
        $region22: #{custom-call.6} parent=8 // pred_check_branch
          %24 = sbr.rel (0) target = $region24
        $region23: #{custom-call.6} parent=8 // pred_region
          loop: start=0, step=1, limit=1
          $region25: #{custom-call.6} parent=23 // loop_pre_header
            _
          $region26: #{custom-call.6} parent=23 // loop_header
            %s26 = sphi 0, %s30
            %p27 = scmp.ge.s32.totalorder %s26, 1
            %s31 = sphi %s0, %s0
            %s32 = sphi [#allocation0], [#allocation0]
          $region27: #{custom-call.6} parent=23 // loop_header_branch
            %29 = sbr.rel (%p27) target = $region31
          $region28: #{custom-call.6} parent=23 // loop_body
            %v33 = vld [vmem:[%s31] sm:$0xff]
            %34 = vst [vmem:[%s32] sm:$0xff] %v33
            %v35 = vld [vmem:[%s31 + $0x8] sm:$0xff]
            %36 = vst [vmem:[%s32 + $0x8] sm:$0xff] %v35
            %v37 = vld [vmem:[%s31 + $0x10] sm:$0xff]
            %38 = vst [vmem:[%s32 + $0x10] sm:$0xff] %v37
          $region29: #{custom-call.6} parent=23 // loop_footer
            %s30 = sadd.s32 1, %s26
          $region30: #{custom-call.6} parent=23 // loop_footer_branch
            %25 = sbr.rel target = $region26
          $region31: #{custom-call.6} parent=23 // loop_exit
            _
        $region24: #{custom-call.6} parent=8 // pred_fallthru
          _
        // Predicated region
        $region32: #{custom-call.6} parent=8 // pred_check
          _
        $region33: #{custom-call.6} parent=8 // pred_check_branch
          %40 = sbr.rel target = $region35
        $region34: #{custom-call.6} parent=8 // pred_region
          _
        $region35: #{custom-call.6} parent=8 // pred_fallthru
          _
      $region9: #{custom-call.6} parent=4 // pred_fallthru
        _
      // Predicated region
      $region10: #{custom-call.6} parent=4 // pred_check
        _
      $region11: #{custom-call.6} parent=4 // pred_check_branch
        %7 = sbr.rel target = $region13
      $region12: #{custom-call.6} parent=4 // pred_region
        loop: start=0, step=1, limit=1
        $region14: #{custom-call.6} parent=12 // loop_pre_header
          _
        $region15: #{custom-call.6} parent=12 // loop_header
          %s10 = sphi 0, %s14
          %p11 = scmp.ge.s32.totalorder %s10, 1
          %s15 = sphi %s0, %s0
          %s16 = sphi [#allocation0], [#allocation0]
        $region16: #{custom-call.6} parent=12 // loop_header_branch
          %13 = sbr.rel (%p11) target = $region20
        $region17: #{custom-call.6} parent=12 // loop_body
          %v17 = vld [vmem:[%s15] sm:$0xff]
          %18 = vst [vmem:[%s16] sm:$0xff] %v17
          %v19 = vld [vmem:[%s15 + $0x8] sm:$0xff]
          %20 = vst [vmem:[%s16 + $0x8] sm:$0xff] %v19
          %v21 = vld [vmem:[%s15 + $0x10] sm:$0xff]
          %22 = vst [vmem:[%s16 + $0x10] sm:$0xff] %v21
        $region18: #{custom-call.6} parent=12 // loop_footer
          %s14 = sadd.s32 1, %s10
        $region19: #{custom-call.6} parent=12 // loop_footer_branch
          %9 = sbr.rel target = $region15
        $region20: #{custom-call.6} parent=12 // loop_exit
          _
      $region13: #{custom-call.6} parent=4 // pred_fallthru
        _
    $region5: #{custom-call.6} parent=1 // pred_fallthru
      _
    %41 = vnop
    %42 = vst [vmem:[#allocation1] sm:$0xff] 0.0
    %s43 = scalar_lea.vmem [#allocation1], 8
    %44 = vst [vmem:[%s43] sm:$0xff] 0.0
    %s45 = scalar_lea.vmem [#allocation1], 16
    %46 = vst [vmem:[%s45] sm:$0xff] 0.0
    %vm47 = vcmask 7168
    %v48 = vld [vmem:[#allocation1] ss:$0 sm:$0xff]
    %v49 = vld [vmem:[#allocation0] ss:$0 sm:$0xff]
    %v50 = vmul.f32 %v48, %v48
    %51 = vadd.xlane.f32.xlu0 %v50
    %v52 = vpop.xlane.xlu0 %51
    %v53 = vsub.f32 %v49, %v52
    %v54 = vrsqrt.pop %v53
    %v55 = vld [vmem:[#allocation0] sm:$0xff]
    %v56 = vld [vmem:[#allocation1] sm:$0xff]
    %v57 = vmul.f32 %v56, %v48
    %58 = vadd.xlane.f32.xlu0 %v57
    %v59 = vpop.xlane.xlu0 %58
    %v60 = vsub.f32 %v55, %v59
    %v61 = vmul.f32 %v60, %v54
    %v62 = vsel %vm47, %v61, 0.0
    %v63 = vadd.f32 %v56, %v62
    %64 = vst [vmem:[#allocation1] sm:$0xff] %v63
    %s65 = scalar_lea.vmem [#allocation0], 8
    %v66 = vld [vmem:[%s65] sm:$0xff]
    %s67 = scalar_lea.vmem [#allocation1], 8
    %v68 = vld [vmem:[%s67] sm:$0xff]
    %v69 = vmul.f32 %v68, %v48
    %70 = vadd.xlane.f32.xlu0 %v69
    %v71 = vpop.xlane.xlu0 %70
    %v72 = vsub.f32 %v66, %v71
    %v73 = vmul.f32 %v72, %v54
    %v74 = vsel %vm47, %v73, 0.0
    %v75 = vadd.f32 %v68, %v74
    %s76 = scalar_lea.vmem [#allocation1], 8
    %77 = vst [vmem:[%s76] sm:$0xff] %v75
    %s78 = scalar_lea.vmem [#allocation0], 16
    %v79 = vld [vmem:[%s78] sm:$0xff]
    %s80 = scalar_lea.vmem [#allocation1], 16
    %v81 = vld [vmem:[%s80] sm:$0xff]
    %v82 = vmul.f32 %v81, %v48
    %83 = vadd.xlane.f32.xlu0 %v82
    %v84 = vpop.xlane.xlu0 %83
    %v85 = vsub.f32 %v79, %v84
    %v86 = vmul.f32 %v85, %v54
    %v87 = vsel %vm47, %v86, 0.0
    %v88 = vadd.f32 %v81, %v87
    %s89 = scalar_lea.vmem [#allocation1], 16
    %90 = vst [vmem:[%s89] sm:$0xff] %v88
    %vm91 = vcmask 15368
    %s92 = scalar_lea.vmem [#allocation1], 1
    %v93 = vld [vmem:[%s92] ss:$0 sm:$0xff]
    %s94 = scalar_lea.vmem [#allocation0], 1
    %v95 = vld [vmem:[%s94] ss:$0 sm:$0xff]
    %v96 = vmul.f32 %v93, %v93
    %97 = vadd.xlane.f32.xlu0 %v96
    %v98 = vpop.xlane.xlu0 %97
    %v99 = vsub.f32 %v95, %v98
    %v100 = vrsqrt.pop %v99
    %v101 = vld [vmem:[#allocation0] sm:$0xff]
    %v102 = vld [vmem:[#allocation1] sm:$0xff]
    %v103 = vmul.f32 %v102, %v93
    %104 = vadd.xlane.f32.xlu0 %v103
    %v105 = vpop.xlane.xlu0 %104
    %v106 = vsub.f32 %v101, %v105
    %v107 = vmul.f32 %v106, %v100
    %vm108 = vcmask 1047553
    %vm109 = vmand %vm91, %vm108
    %v110 = vsel %vm109, %v107, 0.0
    %v111 = vadd.f32 %v102, %v110
    %112 = vst [vmem:[#allocation1] sm:$0xff] %v111
    %s113 = scalar_lea.vmem [#allocation0], 8
    %v114 = vld [vmem:[%s113] sm:$0xff]
    %s115 = scalar_lea.vmem [#allocation1], 8
    %v116 = vld [vmem:[%s115] sm:$0xff]
    %v117 = vmul.f32 %v116, %v93
    %118 = vadd.xlane.f32.xlu0 %v117
    %v119 = vpop.xlane.xlu0 %118
    %v120 = vsub.f32 %v114, %v119
    %v121 = vmul.f32 %v120, %v100
    %v122 = vsel %vm91, %v121, 0.0
    %v123 = vadd.f32 %v116, %v122
    %s124 = scalar_lea.vmem [#allocation1], 8
    %125 = vst [vmem:[%s124] sm:$0xff] %v123
    %s126 = scalar_lea.vmem [#allocation0], 16
    %v127 = vld [vmem:[%s126] sm:$0xff]
    %s128 = scalar_lea.vmem [#allocation1], 16
    %v129 = vld [vmem:[%s128] sm:$0xff]
    %v130 = vmul.f32 %v129, %v93
    %131 = vadd.xlane.f32.xlu0 %v130
    %v132 = vpop.xlane.xlu0 %131
    %v133 = vsub.f32 %v127, %v132
    %v134 = vmul.f32 %v133, %v100
    %v135 = vsel %vm91, %v134, 0.0
    %v136 = vadd.f32 %v129, %v135
    %s137 = scalar_lea.vmem [#allocation1], 16
    %138 = vst [vmem:[%s137] sm:$0xff] %v136
    %vm139 = vcmask 23568
    %s140 = scalar_lea.vmem [#allocation1], 2
    %v141 = vld [vmem:[%s140] ss:$0 sm:$0xff]
    %s142 = scalar_lea.vmem [#allocation0], 2
    %v143 = vld [vmem:[%s142] ss:$0 sm:$0xff]
    %v144 = vmul.f32 %v141, %v141
    %145 = vadd.xlane.f32.xlu0 %v144
    %v146 = vpop.xlane.xlu0 %145
    %v147 = vsub.f32 %v143, %v146
    %v148 = vrsqrt.pop %v147
    %v149 = vld [vmem:[#allocation0] sm:$0xff]
    %v150 = vld [vmem:[#allocation1] sm:$0xff]
    %v151 = vmul.f32 %v150, %v141
    %152 = vadd.xlane.f32.xlu0 %v151
    %v153 = vpop.xlane.xlu0 %152
    %v154 = vsub.f32 %v149, %v153
    %v155 = vmul.f32 %v154, %v148
    %vm156 = vcmask 1047554
    %vm157 = vmand %vm139, %vm156
    %v158 = vsel %vm157, %v155, 0.0
    %v159 = vadd.f32 %v150, %v158
    %160 = vst [vmem:[#allocation1] sm:$0xff] %v159
    %s161 = scalar_lea.vmem [#allocation0], 8
    %v162 = vld [vmem:[%s161] sm:$0xff]
    %s163 = scalar_lea.vmem [#allocation1], 8
    %v164 = vld [vmem:[%s163] sm:$0xff]
    %v165 = vmul.f32 %v164, %v141
    %166 = vadd.xlane.f32.xlu0 %v165
    %v167 = vpop.xlane.xlu0 %166
    %v168 = vsub.f32 %v162, %v167
    %v169 = vmul.f32 %v168, %v148
    %v170 = vsel %vm139, %v169, 0.0
    %v171 = vadd.f32 %v164, %v170
    %s172 = scalar_lea.vmem [#allocation1], 8
    %173 = vst [vmem:[%s172] sm:$0xff] %v171
    %s174 = scalar_lea.vmem [#allocation0], 16
    %v175 = vld [vmem:[%s174] sm:$0xff]
    %s176 = scalar_lea.vmem [#allocation1], 16
    %v177 = vld [vmem:[%s176] sm:$0xff]
    %v178 = vmul.f32 %v177, %v141
    %179 = vadd.xlane.f32.xlu0 %v178
    %v180 = vpop.xlane.xlu0 %179
    %v181 = vsub.f32 %v175, %v180
    %v182 = vmul.f32 %v181, %v148
    %v183 = vsel %vm139, %v182, 0.0
    %v184 = vadd.f32 %v177, %v183
    %s185 = scalar_lea.vmem [#allocation1], 16
    %186 = vst [vmem:[%s185] sm:$0xff] %v184
    %vm187 = vcmask 31768
    %s188 = scalar_lea.vmem [#allocation1], 3
    %v189 = vld [vmem:[%s188] ss:$0 sm:$0xff]
    %s190 = scalar_lea.vmem [#allocation0], 3
    %v191 = vld [vmem:[%s190] ss:$0 sm:$0xff]
    %v192 = vmul.f32 %v189, %v189
    %193 = vadd.xlane.f32.xlu0 %v192
    %v194 = vpop.xlane.xlu0 %193
    %v195 = vsub.f32 %v191, %v194
    %v196 = vrsqrt.pop %v195
    %v197 = vld [vmem:[#allocation0] sm:$0xff]
    %v198 = vld [vmem:[#allocation1] sm:$0xff]
    %v199 = vmul.f32 %v198, %v189
    %200 = vadd.xlane.f32.xlu0 %v199
    %v201 = vpop.xlane.xlu0 %200
    %v202 = vsub.f32 %v197, %v201
    %v203 = vmul.f32 %v202, %v196
    %vm204 = vcmask 1047555
    %vm205 = vmand %vm187, %vm204
    %v206 = vsel %vm205, %v203, 0.0
    %v207 = vadd.f32 %v198, %v206
    %208 = vst [vmem:[#allocation1] sm:$0xff] %v207
    %s209 = scalar_lea.vmem [#allocation0], 8
    %v210 = vld [vmem:[%s209] sm:$0xff]
    %s211 = scalar_lea.vmem [#allocation1], 8
    %v212 = vld [vmem:[%s211] sm:$0xff]
    %v213 = vmul.f32 %v212, %v189
    %214 = vadd.xlane.f32.xlu0 %v213
    %v215 = vpop.xlane.xlu0 %214
    %v216 = vsub.f32 %v210, %v215
    %v217 = vmul.f32 %v216, %v196
    %v218 = vsel %vm187, %v217, 0.0
    %v219 = vadd.f32 %v212, %v218
    %s220 = scalar_lea.vmem [#allocation1], 8
    %221 = vst [vmem:[%s220] sm:$0xff] %v219
    %s222 = scalar_lea.vmem [#allocation0], 16
    %v223 = vld [vmem:[%s222] sm:$0xff]
    %s224 = scalar_lea.vmem [#allocation1], 16
    %v225 = vld [vmem:[%s224] sm:$0xff]
    %v226 = vmul.f32 %v225, %v189
    %227 = vadd.xlane.f32.xlu0 %v226
    %v228 = vpop.xlane.xlu0 %227
    %v229 = vsub.f32 %v223, %v228
    %v230 = vmul.f32 %v229, %v196
    %v231 = vsel %vm187, %v230, 0.0
    %v232 = vadd.f32 %v225, %v231
    %s233 = scalar_lea.vmem [#allocation1], 16
    %234 = vst [vmem:[%s233] sm:$0xff] %v232
    %vm235 = vcmask 39968
    %s236 = scalar_lea.vmem [#allocation1], 4
    %v237 = vld [vmem:[%s236] ss:$0 sm:$0xff]
    %s238 = scalar_lea.vmem [#allocation0], 4
    %v239 = vld [vmem:[%s238] ss:$0 sm:$0xff]
    %v240 = vmul.f32 %v237, %v237
    %241 = vadd.xlane.f32.xlu0 %v240
    %v242 = vpop.xlane.xlu0 %241
    %v243 = vsub.f32 %v239, %v242
    %v244 = vrsqrt.pop %v243
    %v245 = vld [vmem:[#allocation0] sm:$0xff]
    %v246 = vld [vmem:[#allocation1] sm:$0xff]
    %v247 = vmul.f32 %v246, %v237
    %248 = vadd.xlane.f32.xlu0 %v247
    %v249 = vpop.xlane.xlu0 %248
    %v250 = vsub.f32 %v245, %v249
    %v251 = vmul.f32 %v250, %v244
    %vm252 = vcmask 1047556
    %vm253 = vmand %vm235, %vm252
    %v254 = vsel %vm253, %v251, 0.0
    %v255 = vadd.f32 %v246, %v254
    %256 = vst [vmem:[#allocation1] sm:$0xff] %v255
    %s257 = scalar_lea.vmem [#allocation0], 8
    %v258 = vld [vmem:[%s257] sm:$0xff]
    %s259 = scalar_lea.vmem [#allocation1], 8
    %v260 = vld [vmem:[%s259] sm:$0xff]
    %v261 = vmul.f32 %v260, %v237
    %262 = vadd.xlane.f32.xlu0 %v261
    %v263 = vpop.xlane.xlu0 %262
    %v264 = vsub.f32 %v258, %v263
    %v265 = vmul.f32 %v264, %v244
    %v266 = vsel %vm235, %v265, 0.0
    %v267 = vadd.f32 %v260, %v266
    %s268 = scalar_lea.vmem [#allocation1], 8
    %269 = vst [vmem:[%s268] sm:$0xff] %v267
    %s270 = scalar_lea.vmem [#allocation0], 16
    %v271 = vld [vmem:[%s270] sm:$0xff]
    %s272 = scalar_lea.vmem [#allocation1], 16
    %v273 = vld [vmem:[%s272] sm:$0xff]
    %v274 = vmul.f32 %v273, %v237
    %275 = vadd.xlane.f32.xlu0 %v274
    %v276 = vpop.xlane.xlu0 %275
    %v277 = vsub.f32 %v271, %v276
    %v278 = vmul.f32 %v277, %v244
    %v279 = vsel %vm235, %v278, 0.0
    %v280 = vadd.f32 %v273, %v279
    %s281 = scalar_lea.vmem [#allocation1], 16
    %282 = vst [vmem:[%s281] sm:$0xff] %v280
    %vm283 = vcmask 48168
    %s284 = scalar_lea.vmem [#allocation1], 5
    %v285 = vld [vmem:[%s284] ss:$0 sm:$0xff]
    %s286 = scalar_lea.vmem [#allocation0], 5
    %v287 = vld [vmem:[%s286] ss:$0 sm:$0xff]
    %v288 = vmul.f32 %v285, %v285
    %289 = vadd.xlane.f32.xlu0 %v288
    %v290 = vpop.xlane.xlu0 %289
    %v291 = vsub.f32 %v287, %v290
    %v292 = vrsqrt.pop %v291
    %v293 = vld [vmem:[#allocation0] sm:$0xff]
    %v294 = vld [vmem:[#allocation1] sm:$0xff]
    %v295 = vmul.f32 %v294, %v285
    %296 = vadd.xlane.f32.xlu0 %v295
    %v297 = vpop.xlane.xlu0 %296
    %v298 = vsub.f32 %v293, %v297
    %v299 = vmul.f32 %v298, %v292
    %vm300 = vcmask 1047557
    %vm301 = vmand %vm283, %vm300
    %v302 = vsel %vm301, %v299, 0.0
    %v303 = vadd.f32 %v294, %v302
    %304 = vst [vmem:[#allocation1] sm:$0xff] %v303
    %s305 = scalar_lea.vmem [#allocation0], 8
    %v306 = vld [vmem:[%s305] sm:$0xff]
    %s307 = scalar_lea.vmem [#allocation1], 8
    %v308 = vld [vmem:[%s307] sm:$0xff]
    %v309 = vmul.f32 %v308, %v285
    %310 = vadd.xlane.f32.xlu0 %v309
    %v311 = vpop.xlane.xlu0 %310
    %v312 = vsub.f32 %v306, %v311
    %v313 = vmul.f32 %v312, %v292
    %v314 = vsel %vm283, %v313, 0.0
    %v315 = vadd.f32 %v308, %v314
    %s316 = scalar_lea.vmem [#allocation1], 8
    %317 = vst [vmem:[%s316] sm:$0xff] %v315
    %s318 = scalar_lea.vmem [#allocation0], 16
    %v319 = vld [vmem:[%s318] sm:$0xff]
    %s320 = scalar_lea.vmem [#allocation1], 16
    %v321 = vld [vmem:[%s320] sm:$0xff]
    %v322 = vmul.f32 %v321, %v285
    %323 = vadd.xlane.f32.xlu0 %v322
    %v324 = vpop.xlane.xlu0 %323
    %v325 = vsub.f32 %v319, %v324
    %v326 = vmul.f32 %v325, %v292
    %v327 = vsel %vm283, %v326, 0.0
    %v328 = vadd.f32 %v321, %v327
    %s329 = scalar_lea.vmem [#allocation1], 16
    %330 = vst [vmem:[%s329] sm:$0xff] %v328
    %vm331 = vcmask 56368
    %s332 = scalar_lea.vmem [#allocation1], 6
    %v333 = vld [vmem:[%s332] ss:$0 sm:$0xff]
    %s334 = scalar_lea.vmem [#allocation0], 6
    %v335 = vld [vmem:[%s334] ss:$0 sm:$0xff]
    %v336 = vmul.f32 %v333, %v333
    %337 = vadd.xlane.f32.xlu0 %v336
    %v338 = vpop.xlane.xlu0 %337
    %v339 = vsub.f32 %v335, %v338
    %v340 = vrsqrt.pop %v339
    %v341 = vld [vmem:[#allocation0] sm:$0xff]
    %v342 = vld [vmem:[#allocation1] sm:$0xff]
    %v343 = vmul.f32 %v342, %v333
    %344 = vadd.xlane.f32.xlu0 %v343
    %v345 = vpop.xlane.xlu0 %344
    %v346 = vsub.f32 %v341, %v345
    %v347 = vmul.f32 %v346, %v340
    %vm348 = vcmask 1047558
    %vm349 = vmand %vm331, %vm348
    %v350 = vsel %vm349, %v347, 0.0
    %v351 = vadd.f32 %v342, %v350
    %352 = vst [vmem:[#allocation1] sm:$0xff] %v351
    %s353 = scalar_lea.vmem [#allocation0], 8
    %v354 = vld [vmem:[%s353] sm:$0xff]
    %s355 = scalar_lea.vmem [#allocation1], 8
    %v356 = vld [vmem:[%s355] sm:$0xff]
    %v357 = vmul.f32 %v356, %v333
    %358 = vadd.xlane.f32.xlu0 %v357
    %v359 = vpop.xlane.xlu0 %358
    %v360 = vsub.f32 %v354, %v359
    %v361 = vmul.f32 %v360, %v340
    %v362 = vsel %vm331, %v361, 0.0
    %v363 = vadd.f32 %v356, %v362
    %s364 = scalar_lea.vmem [#allocation1], 8
    %365 = vst [vmem:[%s364] sm:$0xff] %v363
    %s366 = scalar_lea.vmem [#allocation0], 16
    %v367 = vld [vmem:[%s366] sm:$0xff]
    %s368 = scalar_lea.vmem [#allocation1], 16
    %v369 = vld [vmem:[%s368] sm:$0xff]
    %v370 = vmul.f32 %v369, %v333
    %371 = vadd.xlane.f32.xlu0 %v370
    %v372 = vpop.xlane.xlu0 %371
    %v373 = vsub.f32 %v367, %v372
    %v374 = vmul.f32 %v373, %v340
    %v375 = vsel %vm331, %v374, 0.0
    %v376 = vadd.f32 %v369, %v375
    %s377 = scalar_lea.vmem [#allocation1], 16
    %378 = vst [vmem:[%s377] sm:$0xff] %v376
    %vm379 = vcmask 64568
    %s380 = scalar_lea.vmem [#allocation1], 7
    %v381 = vld [vmem:[%s380] ss:$0 sm:$0xff]
    %s382 = scalar_lea.vmem [#allocation0], 7
    %v383 = vld [vmem:[%s382] ss:$0 sm:$0xff]
    %v384 = vmul.f32 %v381, %v381
    %385 = vadd.xlane.f32.xlu0 %v384
    %v386 = vpop.xlane.xlu0 %385
    %v387 = vsub.f32 %v383, %v386
    %v388 = vrsqrt.pop %v387
    %v389 = vld [vmem:[#allocation0] sm:$0xff]
    %v390 = vld [vmem:[#allocation1] sm:$0xff]
    %v391 = vmul.f32 %v390, %v381
    %392 = vadd.xlane.f32.xlu0 %v391
    %v393 = vpop.xlane.xlu0 %392
    %v394 = vsub.f32 %v389, %v393
    %v395 = vmul.f32 %v394, %v388
    %vm396 = vcmask 1047559
    %vm397 = vmand %vm379, %vm396
    %v398 = vsel %vm397, %v395, 0.0
    %v399 = vadd.f32 %v390, %v398
    %400 = vst [vmem:[#allocation1] sm:$0xff] %v399
    %s401 = scalar_lea.vmem [#allocation0], 8
    %v402 = vld [vmem:[%s401] sm:$0xff]
    %s403 = scalar_lea.vmem [#allocation1], 8
    %v404 = vld [vmem:[%s403] sm:$0xff]
    %v405 = vmul.f32 %v404, %v381
    %406 = vadd.xlane.f32.xlu0 %v405
    %v407 = vpop.xlane.xlu0 %406
    %v408 = vsub.f32 %v402, %v407
    %v409 = vmul.f32 %v408, %v388
    %v410 = vsel %vm379, %v409, 0.0
    %v411 = vadd.f32 %v404, %v410
    %s412 = scalar_lea.vmem [#allocation1], 8
    %413 = vst [vmem:[%s412] sm:$0xff] %v411
    %s414 = scalar_lea.vmem [#allocation0], 16
    %v415 = vld [vmem:[%s414] sm:$0xff]
    %s416 = scalar_lea.vmem [#allocation1], 16
    %v417 = vld [vmem:[%s416] sm:$0xff]
    %v418 = vmul.f32 %v417, %v381
    %419 = vadd.xlane.f32.xlu0 %v418
    %v420 = vpop.xlane.xlu0 %419
    %v421 = vsub.f32 %v415, %v420
    %v422 = vmul.f32 %v421, %v388
    %v423 = vsel %vm379, %v422, 0.0
    %v424 = vadd.f32 %v417, %v423
    %s425 = scalar_lea.vmem [#allocation1], 16
    %426 = vst [vmem:[%s425] sm:$0xff] %v424
    %vm427 = vcmask 72768
    %s428 = scalar_lea.vmem [#allocation1], 8
    %v429 = vld [vmem:[%s428] ss:$0 sm:$0xff]
    %s430 = scalar_lea.vmem [#allocation0], 8
    %v431 = vld [vmem:[%s430] ss:$0 sm:$0xff]
    %v432 = vmul.f32 %v429, %v429
    %433 = vadd.xlane.f32.xlu0 %v432
    %v434 = vpop.xlane.xlu0 %433
    %v435 = vsub.f32 %v431, %v434
    %v436 = vrsqrt.pop %v435
    %s437 = scalar_lea.vmem [#allocation0], 8
    %v438 = vld [vmem:[%s437] sm:$0xff]
    %s439 = scalar_lea.vmem [#allocation1], 8
    %v440 = vld [vmem:[%s439] sm:$0xff]
    %v441 = vmul.f32 %v440, %v429
    %442 = vadd.xlane.f32.xlu0 %v441
    %v443 = vpop.xlane.xlu0 %442
    %v444 = vsub.f32 %v438, %v443
    %v445 = vmul.f32 %v444, %v436
    %v446 = vsel %vm427, %v445, 0.0
    %v447 = vadd.f32 %v440, %v446
    %s448 = scalar_lea.vmem [#allocation1], 8
    %449 = vst [vmem:[%s448] sm:$0xff] %v447
    %s450 = scalar_lea.vmem [#allocation0], 16
    %v451 = vld [vmem:[%s450] sm:$0xff]
    %s452 = scalar_lea.vmem [#allocation1], 16
    %v453 = vld [vmem:[%s452] sm:$0xff]
    %v454 = vmul.f32 %v453, %v429
    %455 = vadd.xlane.f32.xlu0 %v454
    %v456 = vpop.xlane.xlu0 %455
    %v457 = vsub.f32 %v451, %v456
    %v458 = vmul.f32 %v457, %v436
    %v459 = vsel %vm427, %v458, 0.0
    %v460 = vadd.f32 %v453, %v459
    %s461 = scalar_lea.vmem [#allocation1], 16
    %462 = vst [vmem:[%s461] sm:$0xff] %v460
    %vm463 = vcmask 80968
    %s464 = scalar_lea.vmem [#allocation1], 9
    %v465 = vld [vmem:[%s464] ss:$0 sm:$0xff]
    %s466 = scalar_lea.vmem [#allocation0], 9
    %v467 = vld [vmem:[%s466] ss:$0 sm:$0xff]
    %v468 = vmul.f32 %v465, %v465
    %469 = vadd.xlane.f32.xlu0 %v468
    %v470 = vpop.xlane.xlu0 %469
    %v471 = vsub.f32 %v467, %v470
    %v472 = vrsqrt.pop %v471
    %s473 = scalar_lea.vmem [#allocation0], 8
    %v474 = vld [vmem:[%s473] sm:$0xff]
    %s475 = scalar_lea.vmem [#allocation1], 8
    %v476 = vld [vmem:[%s475] sm:$0xff]
    %v477 = vmul.f32 %v476, %v465
    %478 = vadd.xlane.f32.xlu0 %v477
    %v479 = vpop.xlane.xlu0 %478
    %v480 = vsub.f32 %v474, %v479
    %v481 = vmul.f32 %v480, %v472
    %vm482 = vcmask 1047553
    %vm483 = vmand %vm463, %vm482
    %v484 = vsel %vm483, %v481, 0.0
    %v485 = vadd.f32 %v476, %v484
    %s486 = scalar_lea.vmem [#allocation1], 8
    %487 = vst [vmem:[%s486] sm:$0xff] %v485
    %s488 = scalar_lea.vmem [#allocation0], 16
    %v489 = vld [vmem:[%s488] sm:$0xff]
    %s490 = scalar_lea.vmem [#allocation1], 16
    %v491 = vld [vmem:[%s490] sm:$0xff]
    %v492 = vmul.f32 %v491, %v465
    %493 = vadd.xlane.f32.xlu0 %v492
    %v494 = vpop.xlane.xlu0 %493
    %v495 = vsub.f32 %v489, %v494
    %v496 = vmul.f32 %v495, %v472
    %v497 = vsel %vm463, %v496, 0.0
    %v498 = vadd.f32 %v491, %v497
    %s499 = scalar_lea.vmem [#allocation1], 16
    %500 = vst [vmem:[%s499] sm:$0xff] %v498
    %vm501 = vcmask 89168
    %s502 = scalar_lea.vmem [#allocation1], 10
    %v503 = vld [vmem:[%s502] ss:$0 sm:$0xff]
    %s504 = scalar_lea.vmem [#allocation0], 10
    %v505 = vld [vmem:[%s504] ss:$0 sm:$0xff]
    %v506 = vmul.f32 %v503, %v503
    %507 = vadd.xlane.f32.xlu0 %v506
    %v508 = vpop.xlane.xlu0 %507
    %v509 = vsub.f32 %v505, %v508
    %v510 = vrsqrt.pop %v509
    %s511 = scalar_lea.vmem [#allocation0], 8
    %v512 = vld [vmem:[%s511] sm:$0xff]
    %s513 = scalar_lea.vmem [#allocation1], 8
    %v514 = vld [vmem:[%s513] sm:$0xff]
    %v515 = vmul.f32 %v514, %v503
    %516 = vadd.xlane.f32.xlu0 %v515
    %v517 = vpop.xlane.xlu0 %516
    %v518 = vsub.f32 %v512, %v517
    %v519 = vmul.f32 %v518, %v510
    %vm520 = vcmask 1047554
    %vm521 = vmand %vm501, %vm520
    %v522 = vsel %vm521, %v519, 0.0
    %v523 = vadd.f32 %v514, %v522
    %s524 = scalar_lea.vmem [#allocation1], 8
    %525 = vst [vmem:[%s524] sm:$0xff] %v523
    %s526 = scalar_lea.vmem [#allocation0], 16
    %v527 = vld [vmem:[%s526] sm:$0xff]
    %s528 = scalar_lea.vmem [#allocation1], 16
    %v529 = vld [vmem:[%s528] sm:$0xff]
    %v530 = vmul.f32 %v529, %v503
    %531 = vadd.xlane.f32.xlu0 %v530
    %v532 = vpop.xlane.xlu0 %531
    %v533 = vsub.f32 %v527, %v532
    %v534 = vmul.f32 %v533, %v510
    %v535 = vsel %vm501, %v534, 0.0
    %v536 = vadd.f32 %v529, %v535
    %s537 = scalar_lea.vmem [#allocation1], 16
    %538 = vst [vmem:[%s537] sm:$0xff] %v536
    %vm539 = vcmask 97368
    %s540 = scalar_lea.vmem [#allocation1], 11
    %v541 = vld [vmem:[%s540] ss:$0 sm:$0xff]
    %s542 = scalar_lea.vmem [#allocation0], 11
    %v543 = vld [vmem:[%s542] ss:$0 sm:$0xff]
    %v544 = vmul.f32 %v541, %v541
    %545 = vadd.xlane.f32.xlu0 %v544
    %v546 = vpop.xlane.xlu0 %545
    %v547 = vsub.f32 %v543, %v546
    %v548 = vrsqrt.pop %v547
    %s549 = scalar_lea.vmem [#allocation0], 8
    %v550 = vld [vmem:[%s549] sm:$0xff]
    %s551 = scalar_lea.vmem [#allocation1], 8
    %v552 = vld [vmem:[%s551] sm:$0xff]
    %v553 = vmul.f32 %v552, %v541
    %554 = vadd.xlane.f32.xlu0 %v553
    %v555 = vpop.xlane.xlu0 %554
    %v556 = vsub.f32 %v550, %v555
    %v557 = vmul.f32 %v556, %v548
    %vm558 = vcmask 1047555
    %vm559 = vmand %vm539, %vm558
    %v560 = vsel %vm559, %v557, 0.0
    %v561 = vadd.f32 %v552, %v560
    %s562 = scalar_lea.vmem [#allocation1], 8
    %563 = vst [vmem:[%s562] sm:$0xff] %v561
    %s564 = scalar_lea.vmem [#allocation0], 16
    %v565 = vld [vmem:[%s564] sm:$0xff]
    %s566 = scalar_lea.vmem [#allocation1], 16
    %v567 = vld [vmem:[%s566] sm:$0xff]
    %v568 = vmul.f32 %v567, %v541
    %569 = vadd.xlane.f32.xlu0 %v568
    %v570 = vpop.xlane.xlu0 %569
    %v571 = vsub.f32 %v565, %v570
    %v572 = vmul.f32 %v571, %v548
    %v573 = vsel %vm539, %v572, 0.0
    %v574 = vadd.f32 %v567, %v573
    %s575 = scalar_lea.vmem [#allocation1], 16
    %576 = vst [vmem:[%s575] sm:$0xff] %v574
    %vm577 = vcmask 105568
    %s578 = scalar_lea.vmem [#allocation1], 12
    %v579 = vld [vmem:[%s578] ss:$0 sm:$0xff]
    %s580 = scalar_lea.vmem [#allocation0], 12
    %v581 = vld [vmem:[%s580] ss:$0 sm:$0xff]
    %v582 = vmul.f32 %v579, %v579
    %583 = vadd.xlane.f32.xlu0 %v582
    %v584 = vpop.xlane.xlu0 %583
    %v585 = vsub.f32 %v581, %v584
    %v586 = vrsqrt.pop %v585
    %s587 = scalar_lea.vmem [#allocation0], 8
    %v588 = vld [vmem:[%s587] sm:$0xff]
    %s589 = scalar_lea.vmem [#allocation1], 8
    %v590 = vld [vmem:[%s589] sm:$0xff]
    %v591 = vmul.f32 %v590, %v579
    %592 = vadd.xlane.f32.xlu0 %v591
    %v593 = vpop.xlane.xlu0 %592
    %v594 = vsub.f32 %v588, %v593
    %v595 = vmul.f32 %v594, %v586
    %vm596 = vcmask 1047556
    %vm597 = vmand %vm577, %vm596
    %v598 = vsel %vm597, %v595, 0.0
    %v599 = vadd.f32 %v590, %v598
    %s600 = scalar_lea.vmem [#allocation1], 8
    %601 = vst [vmem:[%s600] sm:$0xff] %v599
    %s602 = scalar_lea.vmem [#allocation0], 16
    %v603 = vld [vmem:[%s602] sm:$0xff]
    %s604 = scalar_lea.vmem [#allocation1], 16
    %v605 = vld [vmem:[%s604] sm:$0xff]
    %v606 = vmul.f32 %v605, %v579
    %607 = vadd.xlane.f32.xlu0 %v606
    %v608 = vpop.xlane.xlu0 %607
    %v609 = vsub.f32 %v603, %v608
    %v610 = vmul.f32 %v609, %v586
    %v611 = vsel %vm577, %v610, 0.0
    %v612 = vadd.f32 %v605, %v611
    %s613 = scalar_lea.vmem [#allocation1], 16
    %614 = vst [vmem:[%s613] sm:$0xff] %v612
    %vm615 = vcmask 113768
    %s616 = scalar_lea.vmem [#allocation1], 13
    %v617 = vld [vmem:[%s616] ss:$0 sm:$0xff]
    %s618 = scalar_lea.vmem [#allocation0], 13
    %v619 = vld [vmem:[%s618] ss:$0 sm:$0xff]
    %v620 = vmul.f32 %v617, %v617
    %621 = vadd.xlane.f32.xlu0 %v620
    %v622 = vpop.xlane.xlu0 %621
    %v623 = vsub.f32 %v619, %v622
    %v624 = vrsqrt.pop %v623
    %s625 = scalar_lea.vmem [#allocation0], 8
    %v626 = vld [vmem:[%s625] sm:$0xff]
    %s627 = scalar_lea.vmem [#allocation1], 8
    %v628 = vld [vmem:[%s627] sm:$0xff]
    %v629 = vmul.f32 %v628, %v617
    %630 = vadd.xlane.f32.xlu0 %v629
    %v631 = vpop.xlane.xlu0 %630
    %v632 = vsub.f32 %v626, %v631
    %v633 = vmul.f32 %v632, %v624
    %vm634 = vcmask 1047557
    %vm635 = vmand %vm615, %vm634
    %v636 = vsel %vm635, %v633, 0.0
    %v637 = vadd.f32 %v628, %v636
    %s638 = scalar_lea.vmem [#allocation1], 8
    %639 = vst [vmem:[%s638] sm:$0xff] %v637
    %s640 = scalar_lea.vmem [#allocation0], 16
    %v641 = vld [vmem:[%s640] sm:$0xff]
    %s642 = scalar_lea.vmem [#allocation1], 16
    %v643 = vld [vmem:[%s642] sm:$0xff]
    %v644 = vmul.f32 %v643, %v617
    %645 = vadd.xlane.f32.xlu0 %v644
    %v646 = vpop.xlane.xlu0 %645
    %v647 = vsub.f32 %v641, %v646
    %v648 = vmul.f32 %v647, %v624
    %v649 = vsel %vm615, %v648, 0.0
    %v650 = vadd.f32 %v643, %v649
    %s651 = scalar_lea.vmem [#allocation1], 16
    %652 = vst [vmem:[%s651] sm:$0xff] %v650
    %vm653 = vcmask 121968
    %s654 = scalar_lea.vmem [#allocation1], 14
    %v655 = vld [vmem:[%s654] ss:$0 sm:$0xff]
    %s656 = scalar_lea.vmem [#allocation0], 14
    %v657 = vld [vmem:[%s656] ss:$0 sm:$0xff]
    %v658 = vmul.f32 %v655, %v655
    %659 = vadd.xlane.f32.xlu0 %v658
    %v660 = vpop.xlane.xlu0 %659
    %v661 = vsub.f32 %v657, %v660
    %v662 = vrsqrt.pop %v661
    %s663 = scalar_lea.vmem [#allocation0], 8
    %v664 = vld [vmem:[%s663] sm:$0xff]
    %s665 = scalar_lea.vmem [#allocation1], 8
    %v666 = vld [vmem:[%s665] sm:$0xff]
    %v667 = vmul.f32 %v666, %v655
    %668 = vadd.xlane.f32.xlu0 %v667
    %v669 = vpop.xlane.xlu0 %668
    %v670 = vsub.f32 %v664, %v669
    %v671 = vmul.f32 %v670, %v662
    %vm672 = vcmask 1047558
    %vm673 = vmand %vm653, %vm672
    %v674 = vsel %vm673, %v671, 0.0
    %v675 = vadd.f32 %v666, %v674
    %s676 = scalar_lea.vmem [#allocation1], 8
    %677 = vst [vmem:[%s676] sm:$0xff] %v675
    %s678 = scalar_lea.vmem [#allocation0], 16
    %v679 = vld [vmem:[%s678] sm:$0xff]
    %s680 = scalar_lea.vmem [#allocation1], 16
    %v681 = vld [vmem:[%s680] sm:$0xff]
    %v682 = vmul.f32 %v681, %v655
    %683 = vadd.xlane.f32.xlu0 %v682
    %v684 = vpop.xlane.xlu0 %683
    %v685 = vsub.f32 %v679, %v684
    %v686 = vmul.f32 %v685, %v662
    %v687 = vsel %vm653, %v686, 0.0
    %v688 = vadd.f32 %v681, %v687
    %s689 = scalar_lea.vmem [#allocation1], 16
    %690 = vst [vmem:[%s689] sm:$0xff] %v688
    %vm691 = vcmask 130168
    %s692 = scalar_lea.vmem [#allocation1], 15
    %v693 = vld [vmem:[%s692] ss:$0 sm:$0xff]
    %s694 = scalar_lea.vmem [#allocation0], 15
    %v695 = vld [vmem:[%s694] ss:$0 sm:$0xff]
    %v696 = vmul.f32 %v693, %v693
    %697 = vadd.xlane.f32.xlu0 %v696
    %v698 = vpop.xlane.xlu0 %697
    %v699 = vsub.f32 %v695, %v698
    %v700 = vrsqrt.pop %v699
    %s701 = scalar_lea.vmem [#allocation0], 8
    %v702 = vld [vmem:[%s701] sm:$0xff]
    %s703 = scalar_lea.vmem [#allocation1], 8
    %v704 = vld [vmem:[%s703] sm:$0xff]
    %v705 = vmul.f32 %v704, %v693
    %706 = vadd.xlane.f32.xlu0 %v705
    %v707 = vpop.xlane.xlu0 %706
    %v708 = vsub.f32 %v702, %v707
    %v709 = vmul.f32 %v708, %v700
    %vm710 = vcmask 1047559
    %vm711 = vmand %vm691, %vm710
    %v712 = vsel %vm711, %v709, 0.0
    %v713 = vadd.f32 %v704, %v712
    %s714 = scalar_lea.vmem [#allocation1], 8
    %715 = vst [vmem:[%s714] sm:$0xff] %v713
    %s716 = scalar_lea.vmem [#allocation0], 16
    %v717 = vld [vmem:[%s716] sm:$0xff]
    %s718 = scalar_lea.vmem [#allocation1], 16
    %v719 = vld [vmem:[%s718] sm:$0xff]
    %v720 = vmul.f32 %v719, %v693
    %721 = vadd.xlane.f32.xlu0 %v720
    %v722 = vpop.xlane.xlu0 %721
    %v723 = vsub.f32 %v717, %v722
    %v724 = vmul.f32 %v723, %v700
    %v725 = vsel %vm691, %v724, 0.0
    %v726 = vadd.f32 %v719, %v725
    %s727 = scalar_lea.vmem [#allocation1], 16
    %728 = vst [vmem:[%s727] sm:$0xff] %v726
    %vm729 = vcmask 138368
    %s730 = scalar_lea.vmem [#allocation1], 16
    %v731 = vld [vmem:[%s730] ss:$0 sm:$0xff]
    %s732 = scalar_lea.vmem [#allocation0], 16
    %v733 = vld [vmem:[%s732] ss:$0 sm:$0xff]
    %v734 = vmul.f32 %v731, %v731
    %735 = vadd.xlane.f32.xlu0 %v734
    %v736 = vpop.xlane.xlu0 %735
    %v737 = vsub.f32 %v733, %v736
    %v738 = vrsqrt.pop %v737
    %s739 = scalar_lea.vmem [#allocation0], 16
    %v740 = vld [vmem:[%s739] sm:$0xff]
    %s741 = scalar_lea.vmem [#allocation1], 16
    %v742 = vld [vmem:[%s741] sm:$0xff]
    %v743 = vmul.f32 %v742, %v731
    %744 = vadd.xlane.f32.xlu0 %v743
    %v745 = vpop.xlane.xlu0 %744
    %v746 = vsub.f32 %v740, %v745
    %v747 = vmul.f32 %v746, %v738
    %v748 = vsel %vm729, %v747, 0.0
    %v749 = vadd.f32 %v742, %v748
    %s750 = scalar_lea.vmem [#allocation1], 16
    %751 = vst [vmem:[%s750] sm:$0xff] %v749
    %vm752 = vcmask 146568
    %s753 = scalar_lea.vmem [#allocation1], 17
    %v754 = vld [vmem:[%s753] ss:$0 sm:$0xff]
    %s755 = scalar_lea.vmem [#allocation0], 17
    %v756 = vld [vmem:[%s755] ss:$0 sm:$0xff]
    %v757 = vmul.f32 %v754, %v754
    %758 = vadd.xlane.f32.xlu0 %v757
    %v759 = vpop.xlane.xlu0 %758
    %v760 = vsub.f32 %v756, %v759
    %v761 = vrsqrt.pop %v760
    %s762 = scalar_lea.vmem [#allocation0], 16
    %v763 = vld [vmem:[%s762] sm:$0xff]
    %s764 = scalar_lea.vmem [#allocation1], 16
    %v765 = vld [vmem:[%s764] sm:$0xff]
    %v766 = vmul.f32 %v765, %v754
    %767 = vadd.xlane.f32.xlu0 %v766
    %v768 = vpop.xlane.xlu0 %767
    %v769 = vsub.f32 %v763, %v768
    %v770 = vmul.f32 %v769, %v761
    %vm771 = vcmask 1047553
    %vm772 = vmand %vm752, %vm771
    %v773 = vsel %vm772, %v770, 0.0
    %v774 = vadd.f32 %v765, %v773
    %s775 = scalar_lea.vmem [#allocation1], 16
    %776 = vst [vmem:[%s775] sm:$0xff] %v774
    %vm777 = vcmask 154768
    %s778 = scalar_lea.vmem [#allocation1], 18
    %v779 = vld [vmem:[%s778] ss:$0 sm:$0xff]
    %s780 = scalar_lea.vmem [#allocation0], 18
    %v781 = vld [vmem:[%s780] ss:$0 sm:$0xff]
    %v782 = vmul.f32 %v779, %v779
    %783 = vadd.xlane.f32.xlu0 %v782
    %v784 = vpop.xlane.xlu0 %783
    %v785 = vsub.f32 %v781, %v784
    %v786 = vrsqrt.pop %v785
    %s787 = scalar_lea.vmem [#allocation0], 16
    %v788 = vld [vmem:[%s787] sm:$0xff]
    %s789 = scalar_lea.vmem [#allocation1], 16
    %v790 = vld [vmem:[%s789] sm:$0xff]
    %v791 = vmul.f32 %v790, %v779
    %792 = vadd.xlane.f32.xlu0 %v791
    %v793 = vpop.xlane.xlu0 %792
    %v794 = vsub.f32 %v788, %v793
    %v795 = vmul.f32 %v794, %v786
    %vm796 = vcmask 1047554
    %vm797 = vmand %vm777, %vm796
    %v798 = vsel %vm797, %v795, 0.0
    %v799 = vadd.f32 %v790, %v798
    %s800 = scalar_lea.vmem [#allocation1], 16
    %801 = vst [vmem:[%s800] sm:$0xff] %v799
    %vm802 = vcmask 162968
    %s803 = scalar_lea.vmem [#allocation1], 19
    %v804 = vld [vmem:[%s803] ss:$0 sm:$0xff]
    %s805 = scalar_lea.vmem [#allocation0], 19
    %v806 = vld [vmem:[%s805] ss:$0 sm:$0xff]
    %v807 = vmul.f32 %v804, %v804
    %808 = vadd.xlane.f32.xlu0 %v807
    %v809 = vpop.xlane.xlu0 %808
    %v810 = vsub.f32 %v806, %v809
    %v811 = vrsqrt.pop %v810
    %s812 = scalar_lea.vmem [#allocation0], 16
    %v813 = vld [vmem:[%s812] sm:$0xff]
    %s814 = scalar_lea.vmem [#allocation1], 16
    %v815 = vld [vmem:[%s814] sm:$0xff]
    %v816 = vmul.f32 %v815, %v804
    %817 = vadd.xlane.f32.xlu0 %v816
    %v818 = vpop.xlane.xlu0 %817
    %v819 = vsub.f32 %v813, %v818
    %v820 = vmul.f32 %v819, %v811
    %vm821 = vcmask 1047555
    %vm822 = vmand %vm802, %vm821
    %v823 = vsel %vm822, %v820, 0.0
    %v824 = vadd.f32 %v815, %v823
    %s825 = scalar_lea.vmem [#allocation1], 16
    %826 = vst [vmem:[%s825] sm:$0xff] %v824
    %vm827 = vcmask 171168
    %s828 = scalar_lea.vmem [#allocation1], 20
    %v829 = vld [vmem:[%s828] ss:$0 sm:$0xff]
    %s830 = scalar_lea.vmem [#allocation0], 20
    %v831 = vld [vmem:[%s830] ss:$0 sm:$0xff]
    %v832 = vmul.f32 %v829, %v829
    %833 = vadd.xlane.f32.xlu0 %v832
    %v834 = vpop.xlane.xlu0 %833
    %v835 = vsub.f32 %v831, %v834
    %v836 = vrsqrt.pop %v835
    %s837 = scalar_lea.vmem [#allocation0], 16
    %v838 = vld [vmem:[%s837] sm:$0xff]
    %s839 = scalar_lea.vmem [#allocation1], 16
    %v840 = vld [vmem:[%s839] sm:$0xff]
    %v841 = vmul.f32 %v840, %v829
    %842 = vadd.xlane.f32.xlu0 %v841
    %v843 = vpop.xlane.xlu0 %842
    %v844 = vsub.f32 %v838, %v843
    %v845 = vmul.f32 %v844, %v836
    %vm846 = vcmask 1047556
    %vm847 = vmand %vm827, %vm846
    %v848 = vsel %vm847, %v845, 0.0
    %v849 = vadd.f32 %v840, %v848
    %s850 = scalar_lea.vmem [#allocation1], 16
    %851 = vst [vmem:[%s850] sm:$0xff] %v849
    %vm852 = vcmask 179368
    %s853 = scalar_lea.vmem [#allocation1], 21
    %v854 = vld [vmem:[%s853] ss:$0 sm:$0xff]
    %s855 = scalar_lea.vmem [#allocation0], 21
    %v856 = vld [vmem:[%s855] ss:$0 sm:$0xff]
    %v857 = vmul.f32 %v854, %v854
    %858 = vadd.xlane.f32.xlu0 %v857
    %v859 = vpop.xlane.xlu0 %858
    %v860 = vsub.f32 %v856, %v859
    %v861 = vrsqrt.pop %v860
    %s862 = scalar_lea.vmem [#allocation0], 16
    %v863 = vld [vmem:[%s862] sm:$0xff]
    %s864 = scalar_lea.vmem [#allocation1], 16
    %v865 = vld [vmem:[%s864] sm:$0xff]
    %v866 = vmul.f32 %v865, %v854
    %867 = vadd.xlane.f32.xlu0 %v866
    %v868 = vpop.xlane.xlu0 %867
    %v869 = vsub.f32 %v863, %v868
    %v870 = vmul.f32 %v869, %v861
    %vm871 = vcmask 1047557
    %vm872 = vmand %vm852, %vm871
    %v873 = vsel %vm872, %v870, 0.0
    %v874 = vadd.f32 %v865, %v873
    %s875 = scalar_lea.vmem [#allocation1], 16
    %876 = vst [vmem:[%s875] sm:$0xff] %v874
    %vm877 = vcmask 187568
    %s878 = scalar_lea.vmem [#allocation1], 22
    %v879 = vld [vmem:[%s878] ss:$0 sm:$0xff]
    %s880 = scalar_lea.vmem [#allocation0], 22
    %v881 = vld [vmem:[%s880] ss:$0 sm:$0xff]
    %v882 = vmul.f32 %v879, %v879
    %883 = vadd.xlane.f32.xlu0 %v882
    %v884 = vpop.xlane.xlu0 %883
    %v885 = vsub.f32 %v881, %v884
    %v886 = vrsqrt.pop %v885
    %s887 = scalar_lea.vmem [#allocation0], 16
    %v888 = vld [vmem:[%s887] sm:$0xff]
    %s889 = scalar_lea.vmem [#allocation1], 16
    %v890 = vld [vmem:[%s889] sm:$0xff]
    %v891 = vmul.f32 %v890, %v879
    %892 = vadd.xlane.f32.xlu0 %v891
    %v893 = vpop.xlane.xlu0 %892
    %v894 = vsub.f32 %v888, %v893
    %v895 = vmul.f32 %v894, %v886
    %vm896 = vcmask 1047558
    %vm897 = vmand %vm877, %vm896
    %v898 = vsel %vm897, %v895, 0.0
    %v899 = vadd.f32 %v890, %v898
    %s900 = scalar_lea.vmem [#allocation1], 16
    %901 = vst [vmem:[%s900] sm:$0xff] %v899
    %vm902 = vcmask 195768
    %s903 = scalar_lea.vmem [#allocation1], 23
    %v904 = vld [vmem:[%s903] ss:$0 sm:$0xff]
    %s905 = scalar_lea.vmem [#allocation0], 23
    %v906 = vld [vmem:[%s905] ss:$0 sm:$0xff]
    %v907 = vmul.f32 %v904, %v904
    %908 = vadd.xlane.f32.xlu0 %v907
    %v909 = vpop.xlane.xlu0 %908
    %v910 = vsub.f32 %v906, %v909
    %v911 = vrsqrt.pop %v910
    %s912 = scalar_lea.vmem [#allocation0], 16
    %v913 = vld [vmem:[%s912] sm:$0xff]
    %s914 = scalar_lea.vmem [#allocation1], 16
    %v915 = vld [vmem:[%s914] sm:$0xff]
    %v916 = vmul.f32 %v915, %v904
    %917 = vadd.xlane.f32.xlu0 %v916
    %v918 = vpop.xlane.xlu0 %917
    %v919 = vsub.f32 %v913, %v918
    %v920 = vmul.f32 %v919, %v911
    %vm921 = vcmask 1047559
    %vm922 = vmand %vm902, %vm921
    %v923 = vsel %vm922, %v920, 0.0
    %v924 = vadd.f32 %v915, %v923
    %s925 = scalar_lea.vmem [#allocation1], 16
    %926 = vst [vmem:[%s925] sm:$0xff] %v924
    // Predicated region
    $region36: #{custom-call.6} parent=1 // pred_check
      _
    $region37: #{custom-call.6} parent=1 // pred_check_branch
      %928 = sbr.rel (0) target = $region39
    $region38: #{custom-call.6} parent=1 // pred_region
      // Predicated region
      $region40: #{custom-call.6} parent=38 // pred_check
        _
      $region41: #{custom-call.6} parent=38 // pred_check_branch
        %930 = sbr.rel (0) target = $region43
      $region42: #{custom-call.6} parent=38 // pred_region
        // Predicated region
        $region55: #{custom-call.6} parent=42 // pred_check
          _
        $region56: #{custom-call.6} parent=42 // pred_check_branch
          %949 = sbr.rel (0) target = $region58
        $region57: #{custom-call.6} parent=42 // pred_region
          loop: start=0, step=1, limit=1
          $region59: #{custom-call.6} parent=57 // loop_pre_header
            _
          $region60: #{custom-call.6} parent=57 // loop_header
            %s951 = sphi 0, %s955
            %p952 = scmp.ge.s32.totalorder %s951, 1
            %s956 = sphi [#allocation1], [#allocation1]
            %s957 = sphi %s1, %s1
          $region61: #{custom-call.6} parent=57 // loop_header_branch
            %954 = sbr.rel (%p952) target = $region65
          $region62: #{custom-call.6} parent=57 // loop_body
            %v958 = vld [vmem:[%s956] sm:$0xff]
            %959 = vst [vmem:[%s957] sm:$0xff] %v958
            %v960 = vld [vmem:[%s956 + $0x8] sm:$0xff]
            %961 = vst [vmem:[%s957 + $0x8] sm:$0xff] %v960
            %v962 = vld [vmem:[%s956 + $0x10] sm:$0xff]
            %963 = vst [vmem:[%s957 + $0x10] sm:$0xff] %v962
          $region63: #{custom-call.6} parent=57 // loop_footer
            %s955 = sadd.s32 1, %s951
          $region64: #{custom-call.6} parent=57 // loop_footer_branch
            %950 = sbr.rel target = $region60
          $region65: #{custom-call.6} parent=57 // loop_exit
            _
        $region58: #{custom-call.6} parent=42 // pred_fallthru
          _
        // Predicated region
        $region66: #{custom-call.6} parent=42 // pred_check
          _
        $region67: #{custom-call.6} parent=42 // pred_check_branch
          %965 = sbr.rel target = $region69
        $region68: #{custom-call.6} parent=42 // pred_region
          _
        $region69: #{custom-call.6} parent=42 // pred_fallthru
          _
      $region43: #{custom-call.6} parent=38 // pred_fallthru
        _
      // Predicated region
      $region44: #{custom-call.6} parent=38 // pred_check
        _
      $region45: #{custom-call.6} parent=38 // pred_check_branch
        %932 = sbr.rel target = $region47
      $region46: #{custom-call.6} parent=38 // pred_region
        loop: start=0, step=1, limit=1
        $region48: #{custom-call.6} parent=46 // loop_pre_header
          _
        $region49: #{custom-call.6} parent=46 // loop_header
          %s935 = sphi 0, %s939
          %p936 = scmp.ge.s32.totalorder %s935, 1
          %s940 = sphi [#allocation1], [#allocation1]
          %s941 = sphi %s1, %s1
        $region50: #{custom-call.6} parent=46 // loop_header_branch
          %938 = sbr.rel (%p936) target = $region54
        $region51: #{custom-call.6} parent=46 // loop_body
          %v942 = vld [vmem:[%s940] sm:$0xff]
          %943 = vst [vmem:[%s941] sm:$0xff] %v942
          %v944 = vld [vmem:[%s940 + $0x8] sm:$0xff]
          %945 = vst [vmem:[%s941 + $0x8] sm:$0xff] %v944
          %v946 = vld [vmem:[%s940 + $0x10] sm:$0xff]
          %947 = vst [vmem:[%s941 + $0x10] sm:$0xff] %v946
        $region52: #{custom-call.6} parent=46 // loop_footer
          %s939 = sadd.s32 1, %s935
        $region53: #{custom-call.6} parent=46 // loop_footer_branch
          %934 = sbr.rel target = $region49
        $region54: #{custom-call.6} parent=46 // loop_exit
          _
      $region47: #{custom-call.6} parent=38 // pred_fallthru
        _
    $region39: #{custom-call.6} parent=1 // pred_fallthru
      _
    %966 = vnop

// kernel: custom-call.7
$region0: #{custom-call.7}
  %s0 = inlined_call_operand.vmem [shape: f32[1,24,24], index: 0, kind: input, shape index: {}]
  %s1 = inlined_call_operand.vmem [shape: f32[1,24,24], index: 1, kind: output, shape index: {}]
  $region1: #{custom-call.7} parent=0
    #allocation0 [shape = 'u8[12288]{0}', space=vmem, size = 0x3000, scoped, tag = 'operand span for operand 0']
    #allocation1 [shape = 'u8[12288]{0}', space=vmem, size = 0x3000, scoped, tag = 'operand span for operand 1']
    #allocation2 [shape = 'f32[24,24]{1,0}', space=vmem, size = 0x3000, scoped, tag = 'rescaled input a']
    // Predicated region
    $region2: #{custom-call.7} parent=1 // pred_check
      _
    $region3: #{custom-call.7} parent=1 // pred_check_branch
      %3 = sbr.rel (0) target = $region5
    $region4: #{custom-call.7} parent=1 // pred_region
      // Predicated region
      $region6: #{custom-call.7} parent=4 // pred_check
        _
      $region7: #{custom-call.7} parent=4 // pred_check_branch
        %5 = sbr.rel (0) target = $region9
      $region8: #{custom-call.7} parent=4 // pred_region
        // Predicated region
        $region21: #{custom-call.7} parent=8 // pred_check
          _
        $region22: #{custom-call.7} parent=8 // pred_check_branch
          %24 = sbr.rel (0) target = $region24
        $region23: #{custom-call.7} parent=8 // pred_region
          loop: start=0, step=1, limit=1
          $region25: #{custom-call.7} parent=23 // loop_pre_header
            _
          $region26: #{custom-call.7} parent=23 // loop_header
            %s26 = sphi 0, %s30
            %p27 = scmp.ge.s32.totalorder %s26, 1
            %s31 = sphi %s0, %s0
            %s32 = sphi [#allocation0], [#allocation0]
          $region27: #{custom-call.7} parent=23 // loop_header_branch
            %29 = sbr.rel (%p27) target = $region31
          $region28: #{custom-call.7} parent=23 // loop_body
            %v33 = vld [vmem:[%s31] sm:$0xff]
            %34 = vst [vmem:[%s32] sm:$0xff] %v33
            %v35 = vld [vmem:[%s31 + $0x8] sm:$0xff]
            %36 = vst [vmem:[%s32 + $0x8] sm:$0xff] %v35
            %v37 = vld [vmem:[%s31 + $0x10] sm:$0xff]
            %38 = vst [vmem:[%s32 + $0x10] sm:$0xff] %v37
          $region29: #{custom-call.7} parent=23 // loop_footer
            %s30 = sadd.s32 1, %s26
          $region30: #{custom-call.7} parent=23 // loop_footer_branch
            %25 = sbr.rel target = $region26
          $region31: #{custom-call.7} parent=23 // loop_exit
            _
        $region24: #{custom-call.7} parent=8 // pred_fallthru
          _
        // Predicated region
        $region32: #{custom-call.7} parent=8 // pred_check
          _
        $region33: #{custom-call.7} parent=8 // pred_check_branch
          %40 = sbr.rel target = $region35
        $region34: #{custom-call.7} parent=8 // pred_region
          _
        $region35: #{custom-call.7} parent=8 // pred_fallthru
          _
      $region9: #{custom-call.7} parent=4 // pred_fallthru
        _
      // Predicated region
      $region10: #{custom-call.7} parent=4 // pred_check
        _
      $region11: #{custom-call.7} parent=4 // pred_check_branch
        %7 = sbr.rel target = $region13
      $region12: #{custom-call.7} parent=4 // pred_region
        loop: start=0, step=1, limit=1
        $region14: #{custom-call.7} parent=12 // loop_pre_header
          _
        $region15: #{custom-call.7} parent=12 // loop_header
          %s10 = sphi 0, %s14
          %p11 = scmp.ge.s32.totalorder %s10, 1
          %s15 = sphi %s0, %s0
          %s16 = sphi [#allocation0], [#allocation0]
        $region16: #{custom-call.7} parent=12 // loop_header_branch
          %13 = sbr.rel (%p11) target = $region20
        $region17: #{custom-call.7} parent=12 // loop_body
          %v17 = vld [vmem:[%s15] sm:$0xff]
          %18 = vst [vmem:[%s16] sm:$0xff] %v17
          %v19 = vld [vmem:[%s15 + $0x8] sm:$0xff]
          %20 = vst [vmem:[%s16 + $0x8] sm:$0xff] %v19
          %v21 = vld [vmem:[%s15 + $0x10] sm:$0xff]
          %22 = vst [vmem:[%s16 + $0x10] sm:$0xff] %v21
        $region18: #{custom-call.7} parent=12 // loop_footer
          %s14 = sadd.s32 1, %s10
        $region19: #{custom-call.7} parent=12 // loop_footer_branch
          %9 = sbr.rel target = $region15
        $region20: #{custom-call.7} parent=12 // loop_exit
          _
      $region13: #{custom-call.7} parent=4 // pred_fallthru
        _
    $region5: #{custom-call.7} parent=1 // pred_fallthru
      _
    %41 = vnop
    %v42 = vlaneseq
    %v43 = vand.u32 %v42, 127
    %vm44 = vcmp.lt.s32.totalorder %v43, 24
    %v45 = vlaneseq
    %v46 = vshrl.u32 %v45, 7
    %vm48 = vcmp.eq.s32.totalorder %v46, %v43
    %v49 = vld [vmem:[#allocation0] sm:$0xff]
    %v50 = vsel %vm48, %v49, 0.0
    %51 = vadd.xlane.f32.xlu0 %v50
    %v52 = vpop.xlane.xlu0 %51
    %vm53 = vcmp.ge.s32.totalorder %v46, %v43
    %vm54 = vmand %vm53, %vm44
    %v55 = vsel %vm54, %v49, 0.0
    %v56 = vrcp.pop %v52
    %v57 = vmul.f32 %v55, %v56
    %58 = vst [vmem:[#allocation2] sm:$0xff] %v57
    %s59 = scalar_lea.vmem [#allocation0], 8
    %s60 = scalar_lea.vmem [#allocation2], 8
    %v61 = vlaneseq
    %v62 = vshrl.u32 %v61, 7
    %v63 = vadd.s32 %v62, 8
    %vm64 = vcmp.eq.s32.totalorder %v63, %v43
    %v65 = vld [vmem:[%s59] sm:$0xff]
    %v66 = vsel %vm64, %v65, 0.0
    %67 = vadd.xlane.f32.xlu0 %v66
    %v68 = vpop.xlane.xlu0 %67
    %vm69 = vcmp.ge.s32.totalorder %v63, %v43
    %vm70 = vmand %vm69, %vm44
    %v71 = vsel %vm70, %v65, 0.0
    %v72 = vrcp.pop %v68
    %v73 = vmul.f32 %v71, %v72
    %74 = vst [vmem:[%s60] sm:$0xff] %v73
    %s75 = scalar_lea.vmem [#allocation0], 16
    %s76 = scalar_lea.vmem [#allocation2], 16
    %v77 = vlaneseq
    %v78 = vshrl.u32 %v77, 7
    %v79 = vadd.s32 %v78, 16
    %vm80 = vcmp.eq.s32.totalorder %v79, %v43
    %v81 = vld [vmem:[%s75] sm:$0xff]
    %v82 = vsel %vm80, %v81, 0.0
    %83 = vadd.xlane.f32.xlu0 %v82
    %v84 = vpop.xlane.xlu0 %83
    %vm85 = vcmp.ge.s32.totalorder %v79, %v43
    %vm86 = vmand %vm85, %vm44
    %v87 = vsel %vm86, %v81, 0.0
    %v88 = vrcp.pop %v84
    %v89 = vmul.f32 %v87, %v88
    %90 = vst [vmem:[%s76] sm:$0xff] %v89
    %v91 = vlaneseq
    %v92 = vand.u32 %v91, 127
    %v93 = vlaneseq
    %v94 = vshrl.u32 %v93, 7
    %vm96 = vcmp.eq.s32.totalorder %v92, %v94
    %v97 = vlaneseq
    %v98 = vand.u32 %v97, 127
    %vm99 = vcmp.eq.s32.totalorder %v98, 0
    %v100 = vsel %vm99, 1.0, -1.0
    %v101 = vsel %vm96, %v100, 0.0
    %v102 = vlaneseq
    %v103 = vand.u32 %v102, 127
    %v104 = vlaneseq
    %v105 = vshrl.u32 %v104, 7
    %v106 = vadd.s32 %v105, 8
    %vm107 = vcmp.eq.s32.totalorder %v103, %v106
    %v108 = vsel %vm107, -1.0, 0.0
    %v109 = vlaneseq
    %v110 = vand.u32 %v109, 127
    %v111 = vlaneseq
    %v112 = vshrl.u32 %v111, 7
    %v113 = vadd.s32 %v112, 16
    %vm114 = vcmp.eq.s32.totalorder %v110, %v113
    %v115 = vsel %vm114, -1.0, 0.0
    %s116 = scalar_lea.vmem [#allocation2], 1
    %v117 = vld [vmem:[%s116] ss:$0 sm:$0xff]
    %v118 = vxor.u32 %v117, 2147483648
    %v119 = vlaneseq
    %v120 = vand.u32 %v119, 127
    %vm121 = vcmp.eq.s32.totalorder %v120, 1
    %v122 = vmul.f32 %v118, %v101
    %123 = vadd.xlane.f32.xlu0 %v122
    %v124 = vpop.xlane.xlu0 %123
    %v125 = vsel %vm121, %v124, %v101
    %s126 = scalar_lea.vmem [#allocation2], 2
    %v127 = vld [vmem:[%s126] ss:$0 sm:$0xff]
    %v128 = vxor.u32 %v127, 2147483648
    %v129 = vlaneseq
    %v130 = vand.u32 %v129, 127
    %vm131 = vcmp.eq.s32.totalorder %v130, 2
    %v132 = vmul.f32 %v128, %v125
    %133 = vadd.xlane.f32.xlu0 %v132
    %v134 = vpop.xlane.xlu0 %133
    %v135 = vsel %vm131, %v134, %v125
    %s136 = scalar_lea.vmem [#allocation2], 3
    %v137 = vld [vmem:[%s136] ss:$0 sm:$0xff]
    %v138 = vxor.u32 %v137, 2147483648
    %v139 = vlaneseq
    %v140 = vand.u32 %v139, 127
    %vm141 = vcmp.eq.s32.totalorder %v140, 3
    %v142 = vmul.f32 %v138, %v135
    %143 = vadd.xlane.f32.xlu0 %v142
    %v144 = vpop.xlane.xlu0 %143
    %v145 = vsel %vm141, %v144, %v135
    %s146 = scalar_lea.vmem [#allocation2], 4
    %v147 = vld [vmem:[%s146] ss:$0 sm:$0xff]
    %v148 = vxor.u32 %v147, 2147483648
    %v149 = vlaneseq
    %v150 = vand.u32 %v149, 127
    %vm151 = vcmp.eq.s32.totalorder %v150, 4
    %v152 = vmul.f32 %v148, %v145
    %153 = vadd.xlane.f32.xlu0 %v152
    %v154 = vpop.xlane.xlu0 %153
    %v155 = vsel %vm151, %v154, %v145
    %s156 = scalar_lea.vmem [#allocation2], 5
    %v157 = vld [vmem:[%s156] ss:$0 sm:$0xff]
    %v158 = vxor.u32 %v157, 2147483648
    %v159 = vlaneseq
    %v160 = vand.u32 %v159, 127
    %vm161 = vcmp.eq.s32.totalorder %v160, 5
    %v162 = vmul.f32 %v158, %v155
    %163 = vadd.xlane.f32.xlu0 %v162
    %v164 = vpop.xlane.xlu0 %163
    %v165 = vsel %vm161, %v164, %v155
    %s166 = scalar_lea.vmem [#allocation2], 6
    %v167 = vld [vmem:[%s166] ss:$0 sm:$0xff]
    %v168 = vxor.u32 %v167, 2147483648
    %v169 = vlaneseq
    %v170 = vand.u32 %v169, 127
    %vm171 = vcmp.eq.s32.totalorder %v170, 6
    %v172 = vmul.f32 %v168, %v165
    %173 = vadd.xlane.f32.xlu0 %v172
    %v174 = vpop.xlane.xlu0 %173
    %v175 = vsel %vm171, %v174, %v165
    %s176 = scalar_lea.vmem [#allocation2], 7
    %v177 = vld [vmem:[%s176] ss:$0 sm:$0xff]
    %v178 = vxor.u32 %v177, 2147483648
    %v179 = vlaneseq
    %v180 = vand.u32 %v179, 127
    %vm181 = vcmp.eq.s32.totalorder %v180, 7
    %v182 = vmul.f32 %v178, %v175
    %183 = vadd.xlane.f32.xlu0 %v182
    %v184 = vpop.xlane.xlu0 %183
    %v185 = vsel %vm181, %v184, %v175
    %s186 = scalar_lea.vmem [#allocation2], 8
    %v187 = vld [vmem:[%s186] ss:$0 sm:$0xff]
    %v188 = vxor.u32 %v187, 2147483648
    %v189 = vlaneseq
    %v190 = vand.u32 %v189, 127
    %vm191 = vcmp.eq.s32.totalorder %v190, 8
    %v192 = vmul.f32 %v188, %v185
    %193 = vadd.xlane.f32.xlu0 %v192
    %v194 = vpop.xlane.xlu0 %193
    %v195 = vsel %vm191, %v194, %v185
    %v196 = vmul.f32 %v188, %v108
    %197 = vadd.xlane.f32.xlu0 %v196
    %v198 = vpop.xlane.xlu0 %197
    %v199 = vsel %vm191, %v198, %v108
    %s200 = scalar_lea.vmem [#allocation2], 9
    %v201 = vld [vmem:[%s200] ss:$0 sm:$0xff]
    %v202 = vxor.u32 %v201, 2147483648
    %v203 = vlaneseq
    %v204 = vand.u32 %v203, 127
    %vm205 = vcmp.eq.s32.totalorder %v204, 9
    %v206 = vmul.f32 %v202, %v195
    %207 = vadd.xlane.f32.xlu0 %v206
    %v208 = vpop.xlane.xlu0 %207
    %v209 = vsel %vm205, %v208, %v195
    %v210 = vmul.f32 %v202, %v199
    %211 = vadd.xlane.f32.xlu0 %v210
    %v212 = vpop.xlane.xlu0 %211
    %v213 = vsel %vm205, %v212, %v199
    %s214 = scalar_lea.vmem [#allocation2], 10
    %v215 = vld [vmem:[%s214] ss:$0 sm:$0xff]
    %v216 = vxor.u32 %v215, 2147483648
    %v217 = vlaneseq
    %v218 = vand.u32 %v217, 127
    %vm219 = vcmp.eq.s32.totalorder %v218, 10
    %v220 = vmul.f32 %v216, %v209
    %221 = vadd.xlane.f32.xlu0 %v220
    %v222 = vpop.xlane.xlu0 %221
    %v223 = vsel %vm219, %v222, %v209
    %v224 = vmul.f32 %v216, %v213
    %225 = vadd.xlane.f32.xlu0 %v224
    %v226 = vpop.xlane.xlu0 %225
    %v227 = vsel %vm219, %v226, %v213
    %s228 = scalar_lea.vmem [#allocation2], 11
    %v229 = vld [vmem:[%s228] ss:$0 sm:$0xff]
    %v230 = vxor.u32 %v229, 2147483648
    %v231 = vlaneseq
    %v232 = vand.u32 %v231, 127
    %vm233 = vcmp.eq.s32.totalorder %v232, 11
    %v234 = vmul.f32 %v230, %v223
    %235 = vadd.xlane.f32.xlu0 %v234
    %v236 = vpop.xlane.xlu0 %235
    %v237 = vsel %vm233, %v236, %v223
    %v238 = vmul.f32 %v230, %v227
    %239 = vadd.xlane.f32.xlu0 %v238
    %v240 = vpop.xlane.xlu0 %239
    %v241 = vsel %vm233, %v240, %v227
    %s242 = scalar_lea.vmem [#allocation2], 12
    %v243 = vld [vmem:[%s242] ss:$0 sm:$0xff]
    %v244 = vxor.u32 %v243, 2147483648
    %v245 = vlaneseq
    %v246 = vand.u32 %v245, 127
    %vm247 = vcmp.eq.s32.totalorder %v246, 12
    %v248 = vmul.f32 %v244, %v237
    %249 = vadd.xlane.f32.xlu0 %v248
    %v250 = vpop.xlane.xlu0 %249
    %v251 = vsel %vm247, %v250, %v237
    %v252 = vmul.f32 %v244, %v241
    %253 = vadd.xlane.f32.xlu0 %v252
    %v254 = vpop.xlane.xlu0 %253
    %v255 = vsel %vm247, %v254, %v241
    %s256 = scalar_lea.vmem [#allocation2], 13
    %v257 = vld [vmem:[%s256] ss:$0 sm:$0xff]
    %v258 = vxor.u32 %v257, 2147483648
    %v259 = vlaneseq
    %v260 = vand.u32 %v259, 127
    %vm261 = vcmp.eq.s32.totalorder %v260, 13
    %v262 = vmul.f32 %v258, %v251
    %263 = vadd.xlane.f32.xlu0 %v262
    %v264 = vpop.xlane.xlu0 %263
    %v265 = vsel %vm261, %v264, %v251
    %v266 = vmul.f32 %v258, %v255
    %267 = vadd.xlane.f32.xlu0 %v266
    %v268 = vpop.xlane.xlu0 %267
    %v269 = vsel %vm261, %v268, %v255
    %s270 = scalar_lea.vmem [#allocation2], 14
    %v271 = vld [vmem:[%s270] ss:$0 sm:$0xff]
    %v272 = vxor.u32 %v271, 2147483648
    %v273 = vlaneseq
    %v274 = vand.u32 %v273, 127
    %vm275 = vcmp.eq.s32.totalorder %v274, 14
    %v276 = vmul.f32 %v272, %v265
    %277 = vadd.xlane.f32.xlu0 %v276
    %v278 = vpop.xlane.xlu0 %277
    %v279 = vsel %vm275, %v278, %v265
    %v280 = vmul.f32 %v272, %v269
    %281 = vadd.xlane.f32.xlu0 %v280
    %v282 = vpop.xlane.xlu0 %281
    %v283 = vsel %vm275, %v282, %v269
    %s284 = scalar_lea.vmem [#allocation2], 15
    %v285 = vld [vmem:[%s284] ss:$0 sm:$0xff]
    %v286 = vxor.u32 %v285, 2147483648
    %v287 = vlaneseq
    %v288 = vand.u32 %v287, 127
    %vm289 = vcmp.eq.s32.totalorder %v288, 15
    %v290 = vmul.f32 %v286, %v279
    %291 = vadd.xlane.f32.xlu0 %v290
    %v292 = vpop.xlane.xlu0 %291
    %v293 = vsel %vm289, %v292, %v279
    %v294 = vmul.f32 %v286, %v283
    %295 = vadd.xlane.f32.xlu0 %v294
    %v296 = vpop.xlane.xlu0 %295
    %v297 = vsel %vm289, %v296, %v283
    %s298 = scalar_lea.vmem [#allocation2], 16
    %v299 = vld [vmem:[%s298] ss:$0 sm:$0xff]
    %v300 = vxor.u32 %v299, 2147483648
    %v301 = vlaneseq
    %v302 = vand.u32 %v301, 127
    %vm303 = vcmp.eq.s32.totalorder %v302, 16
    %v304 = vmul.f32 %v300, %v293
    %305 = vadd.xlane.f32.xlu0 %v304
    %v306 = vpop.xlane.xlu0 %305
    %v307 = vsel %vm303, %v306, %v293
    %v308 = vmul.f32 %v300, %v297
    %309 = vadd.xlane.f32.xlu0 %v308
    %v310 = vpop.xlane.xlu0 %309
    %v311 = vsel %vm303, %v310, %v297
    %v312 = vmul.f32 %v300, %v115
    %313 = vadd.xlane.f32.xlu0 %v312
    %v314 = vpop.xlane.xlu0 %313
    %v315 = vsel %vm303, %v314, %v115
    %s316 = scalar_lea.vmem [#allocation2], 17
    %v317 = vld [vmem:[%s316] ss:$0 sm:$0xff]
    %v318 = vxor.u32 %v317, 2147483648
    %v319 = vlaneseq
    %v320 = vand.u32 %v319, 127
    %vm321 = vcmp.eq.s32.totalorder %v320, 17
    %v322 = vmul.f32 %v318, %v307
    %323 = vadd.xlane.f32.xlu0 %v322
    %v324 = vpop.xlane.xlu0 %323
    %v325 = vsel %vm321, %v324, %v307
    %v326 = vmul.f32 %v318, %v311
    %327 = vadd.xlane.f32.xlu0 %v326
    %v328 = vpop.xlane.xlu0 %327
    %v329 = vsel %vm321, %v328, %v311
    %v330 = vmul.f32 %v318, %v315
    %331 = vadd.xlane.f32.xlu0 %v330
    %v332 = vpop.xlane.xlu0 %331
    %v333 = vsel %vm321, %v332, %v315
    %s334 = scalar_lea.vmem [#allocation2], 18
    %v335 = vld [vmem:[%s334] ss:$0 sm:$0xff]
    %v336 = vxor.u32 %v335, 2147483648
    %v337 = vlaneseq
    %v338 = vand.u32 %v337, 127
    %vm339 = vcmp.eq.s32.totalorder %v338, 18
    %v340 = vmul.f32 %v336, %v325
    %341 = vadd.xlane.f32.xlu0 %v340
    %v342 = vpop.xlane.xlu0 %341
    %v343 = vsel %vm339, %v342, %v325
    %v344 = vmul.f32 %v336, %v329
    %345 = vadd.xlane.f32.xlu0 %v344
    %v346 = vpop.xlane.xlu0 %345
    %v347 = vsel %vm339, %v346, %v329
    %v348 = vmul.f32 %v336, %v333
    %349 = vadd.xlane.f32.xlu0 %v348
    %v350 = vpop.xlane.xlu0 %349
    %v351 = vsel %vm339, %v350, %v333
    %s352 = scalar_lea.vmem [#allocation2], 19
    %v353 = vld [vmem:[%s352] ss:$0 sm:$0xff]
    %v354 = vxor.u32 %v353, 2147483648
    %v355 = vlaneseq
    %v356 = vand.u32 %v355, 127
    %vm357 = vcmp.eq.s32.totalorder %v356, 19
    %v358 = vmul.f32 %v354, %v343
    %359 = vadd.xlane.f32.xlu0 %v358
    %v360 = vpop.xlane.xlu0 %359
    %v361 = vsel %vm357, %v360, %v343
    %v362 = vmul.f32 %v354, %v347
    %363 = vadd.xlane.f32.xlu0 %v362
    %v364 = vpop.xlane.xlu0 %363
    %v365 = vsel %vm357, %v364, %v347
    %v366 = vmul.f32 %v354, %v351
    %367 = vadd.xlane.f32.xlu0 %v366
    %v368 = vpop.xlane.xlu0 %367
    %v369 = vsel %vm357, %v368, %v351
    %s370 = scalar_lea.vmem [#allocation2], 20
    %v371 = vld [vmem:[%s370] ss:$0 sm:$0xff]
    %v372 = vxor.u32 %v371, 2147483648
    %v373 = vlaneseq
    %v374 = vand.u32 %v373, 127
    %vm375 = vcmp.eq.s32.totalorder %v374, 20
    %v376 = vmul.f32 %v372, %v361
    %377 = vadd.xlane.f32.xlu0 %v376
    %v378 = vpop.xlane.xlu0 %377
    %v379 = vsel %vm375, %v378, %v361
    %v380 = vmul.f32 %v372, %v365
    %381 = vadd.xlane.f32.xlu0 %v380
    %v382 = vpop.xlane.xlu0 %381
    %v383 = vsel %vm375, %v382, %v365
    %v384 = vmul.f32 %v372, %v369
    %385 = vadd.xlane.f32.xlu0 %v384
    %v386 = vpop.xlane.xlu0 %385
    %v387 = vsel %vm375, %v386, %v369
    %s388 = scalar_lea.vmem [#allocation2], 21
    %v389 = vld [vmem:[%s388] ss:$0 sm:$0xff]
    %v390 = vxor.u32 %v389, 2147483648
    %v391 = vlaneseq
    %v392 = vand.u32 %v391, 127
    %vm393 = vcmp.eq.s32.totalorder %v392, 21
    %v394 = vmul.f32 %v390, %v379
    %395 = vadd.xlane.f32.xlu0 %v394
    %v396 = vpop.xlane.xlu0 %395
    %v397 = vsel %vm393, %v396, %v379
    %v398 = vmul.f32 %v390, %v383
    %399 = vadd.xlane.f32.xlu0 %v398
    %v400 = vpop.xlane.xlu0 %399
    %v401 = vsel %vm393, %v400, %v383
    %v402 = vmul.f32 %v390, %v387
    %403 = vadd.xlane.f32.xlu0 %v402
    %v404 = vpop.xlane.xlu0 %403
    %v405 = vsel %vm393, %v404, %v387
    %s406 = scalar_lea.vmem [#allocation2], 22
    %v407 = vld [vmem:[%s406] ss:$0 sm:$0xff]
    %v408 = vxor.u32 %v407, 2147483648
    %v409 = vlaneseq
    %v410 = vand.u32 %v409, 127
    %vm411 = vcmp.eq.s32.totalorder %v410, 22
    %v412 = vmul.f32 %v408, %v397
    %413 = vadd.xlane.f32.xlu0 %v412
    %v414 = vpop.xlane.xlu0 %413
    %v415 = vsel %vm411, %v414, %v397
    %v416 = vmul.f32 %v408, %v401
    %417 = vadd.xlane.f32.xlu0 %v416
    %v418 = vpop.xlane.xlu0 %417
    %v419 = vsel %vm411, %v418, %v401
    %v420 = vmul.f32 %v408, %v405
    %421 = vadd.xlane.f32.xlu0 %v420
    %v422 = vpop.xlane.xlu0 %421
    %v423 = vsel %vm411, %v422, %v405
    %s424 = scalar_lea.vmem [#allocation2], 23
    %v425 = vld [vmem:[%s424] ss:$0 sm:$0xff]
    %v426 = vxor.u32 %v425, 2147483648
    %v427 = vlaneseq
    %v428 = vand.u32 %v427, 127
    %vm429 = vcmp.eq.s32.totalorder %v428, 23
    %v430 = vmul.f32 %v426, %v415
    %431 = vadd.xlane.f32.xlu0 %v430
    %v432 = vpop.xlane.xlu0 %431
    %v433 = vsel %vm429, %v432, %v415
    %v434 = vmul.f32 %v426, %v419
    %435 = vadd.xlane.f32.xlu0 %v434
    %v436 = vpop.xlane.xlu0 %435
    %v437 = vsel %vm429, %v436, %v419
    %v438 = vmul.f32 %v426, %v423
    %439 = vadd.xlane.f32.xlu0 %v438
    %v440 = vpop.xlane.xlu0 %439
    %v441 = vsel %vm429, %v440, %v423
    %v442 = vrcp.pop %v52
    %v443 = vmul.f32 %v433, %v442
    %vm444 = vweird.f32 %v52
    %v445 = vsel %vm444, %v433, %v443
    %446 = vst [vmem:[#allocation1] sm:$0xff] %v445
    %v447 = vrcp.pop %v68
    %v448 = vmul.f32 %v437, %v447
    %vm449 = vweird.f32 %v68
    %v450 = vsel %vm449, %v437, %v448
    %s451 = scalar_lea.vmem [#allocation1], 8
    %452 = vst [vmem:[%s451] sm:$0xff] %v450
    %v453 = vrcp.pop %v84
    %v454 = vmul.f32 %v441, %v453
    %vm455 = vweird.f32 %v84
    %v456 = vsel %vm455, %v441, %v454
    %s457 = scalar_lea.vmem [#allocation1], 16
    %458 = vst [vmem:[%s457] sm:$0xff] %v456
    // Predicated region
    $region36: #{custom-call.7} parent=1 // pred_check
      _
    $region37: #{custom-call.7} parent=1 // pred_check_branch
      %460 = sbr.rel (0) target = $region39
    $region38: #{custom-call.7} parent=1 // pred_region
      // Predicated region
      $region40: #{custom-call.7} parent=38 // pred_check
        _
      $region41: #{custom-call.7} parent=38 // pred_check_branch
        %462 = sbr.rel (0) target = $region43
      $region42: #{custom-call.7} parent=38 // pred_region
        // Predicated region
        $region55: #{custom-call.7} parent=42 // pred_check
          _
        $region56: #{custom-call.7} parent=42 // pred_check_branch
          %481 = sbr.rel (0) target = $region58
        $region57: #{custom-call.7} parent=42 // pred_region
          loop: start=0, step=1, limit=1
          $region59: #{custom-call.7} parent=57 // loop_pre_header
            _
          $region60: #{custom-call.7} parent=57 // loop_header
            %s483 = sphi 0, %s487
            %p484 = scmp.ge.s32.totalorder %s483, 1
            %s488 = sphi [#allocation1], [#allocation1]
            %s489 = sphi %s1, %s1
          $region61: #{custom-call.7} parent=57 // loop_header_branch
            %486 = sbr.rel (%p484) target = $region65
          $region62: #{custom-call.7} parent=57 // loop_body
            %v490 = vld [vmem:[%s488] sm:$0xff]
            %491 = vst [vmem:[%s489] sm:$0xff] %v490
            %v492 = vld [vmem:[%s488 + $0x8] sm:$0xff]
            %493 = vst [vmem:[%s489 + $0x8] sm:$0xff] %v492
            %v494 = vld [vmem:[%s488 + $0x10] sm:$0xff]
            %495 = vst [vmem:[%s489 + $0x10] sm:$0xff] %v494
          $region63: #{custom-call.7} parent=57 // loop_footer
            %s487 = sadd.s32 1, %s483
          $region64: #{custom-call.7} parent=57 // loop_footer_branch
            %482 = sbr.rel target = $region60
          $region65: #{custom-call.7} parent=57 // loop_exit
            _
        $region58: #{custom-call.7} parent=42 // pred_fallthru
          _
        // Predicated region
        $region66: #{custom-call.7} parent=42 // pred_check
          _
        $region67: #{custom-call.7} parent=42 // pred_check_branch
          %497 = sbr.rel target = $region69
        $region68: #{custom-call.7} parent=42 // pred_region
          _
        $region69: #{custom-call.7} parent=42 // pred_fallthru
          _
      $region43: #{custom-call.7} parent=38 // pred_fallthru
        _
      // Predicated region
      $region44: #{custom-call.7} parent=38 // pred_check
        _
      $region45: #{custom-call.7} parent=38 // pred_check_branch
        %464 = sbr.rel target = $region47
      $region46: #{custom-call.7} parent=38 // pred_region
        loop: start=0, step=1, limit=1
        $region48: #{custom-call.7} parent=46 // loop_pre_header
          _
        $region49: #{custom-call.7} parent=46 // loop_header
          %s467 = sphi 0, %s471
          %p468 = scmp.ge.s32.totalorder %s467, 1
          %s472 = sphi [#allocation1], [#allocation1]
          %s473 = sphi %s1, %s1
        $region50: #{custom-call.7} parent=46 // loop_header_branch
          %470 = sbr.rel (%p468) target = $region54
        $region51: #{custom-call.7} parent=46 // loop_body
          %v474 = vld [vmem:[%s472] sm:$0xff]
          %475 = vst [vmem:[%s473] sm:$0xff] %v474
          %v476 = vld [vmem:[%s472 + $0x8] sm:$0xff]
          %477 = vst [vmem:[%s473 + $0x8] sm:$0xff] %v476
          %v478 = vld [vmem:[%s472 + $0x10] sm:$0xff]
          %479 = vst [vmem:[%s473 + $0x10] sm:$0xff] %v478
        $region52: #{custom-call.7} parent=46 // loop_footer
          %s471 = sadd.s32 1, %s467
        $region53: #{custom-call.7} parent=46 // loop_footer_branch
          %466 = sbr.rel target = $region49
        $region54: #{custom-call.7} parent=46 // loop_exit
          _
      $region47: #{custom-call.7} parent=38 // pred_fallthru
        _
    $region39: #{custom-call.7} parent=1 // pred_fallthru
      _
    %498 = vnop

// kernel: mgd_loss_full_eye.1
$region0: #{mgd_loss_full_eye.1}
  #allocation0 [shape = 'u32[]', space=smem, size = 0x4, offset = 0x4, fixed_abs, tag = 'smem constant byte address 0x4 - core index']
  #allocation1 [shape = 'u32[144,128]{1,0:T(1,128)}', space=vmem, size = 0x12000, scoped, tag = 'internal scratch']
  %s0 = inlined_call_operand.vmem [shape: f32[2,128], index: 0, kind: input, shape index: {}]
  %s1 = inlined_call_operand.vmem [shape: f32[2,128], index: 1, kind: input, shape index: {}]
  %s2 = inlined_call_operand.vmem [shape: f32[128,24], index: 2, kind: input, shape index: {}]
  %s3 = inlined_call_operand.vmem [shape: f32[2,24], index: 3, kind: output, shape index: {0}]
  %s4 = inlined_call_operand.vmem [shape: f32[2,8], index: 4, kind: output, shape index: {1}]
  %5 = xla_tuple %s3, %s4
  %s6 = sld [smem:[#allocation0]]
  $region30: #{mgd_loss_full_eye.1} parent=0
    _
  %s8 = ssub.s32 1, %s6
  %s9 = scalar_select 0, %s8, %s6
  // Predicated region
  $region2: #{mgd_loss_full_eye.1} parent=0 // pred_check
    _
  $region3: #{mgd_loss_full_eye.1} parent=0 // pred_check_branch
    %11 = sbr.rel (0) target = $region5
  $region4: #{mgd_loss_full_eye.1} parent=0 // pred_region
    _
  $region5: #{mgd_loss_full_eye.1} parent=0 // pred_fallthru
    _
  // Predicated region
  $region6: #{mgd_loss_full_eye.1} parent=0 // pred_check
    _
  $region7: #{mgd_loss_full_eye.1} parent=0 // pred_check_branch
    %13 = sbr.rel (0) target = $region9
  $region8: #{mgd_loss_full_eye.1} parent=0 // pred_region
    _
  $region9: #{mgd_loss_full_eye.1} parent=0 // pred_fallthru
    _
  // Predicated region
  $region10: #{mgd_loss_full_eye.1} parent=0 // pred_check
    _
  $region11: #{mgd_loss_full_eye.1} parent=0 // pred_check_branch
    %15 = sbr.rel (0) target = $region13
  $region12: #{mgd_loss_full_eye.1} parent=0 // pred_region
    _
  $region13: #{mgd_loss_full_eye.1} parent=0 // pred_fallthru
    _
  %v16 = vld [vmem:[%s0] sm:$0x3]
  %v17 = vld [vmem:[%s1] sm:$0x3]
  %vm18 = vcmp.ne.f32.partialorder %v17, 0.0
  %v19 = vsel %vm18, %v16, 0.0
  %v20 = vmul.f32 %v19, %v19
  %vm21 = vcmask 1041408
  %v22 = vsel %vm21, %v20, 0.0
  %23 = vadd.xlane.f32.xlu0 %v22
  %v24 = vpop.xlane.xlu0 %23
  %vm25 = vcmask 58368
  %26 = vst.msk [vmem:[%s4] sm:$0x3] %vm25, %v24
  %v27 = vld [vmem:[%s2] sm:$0xff]
  %v28 = vld [vmem:[%s2 + $0x8] sm:$0xff]
  %v29 = vld [vmem:[%s2 + $0x10] sm:$0xff]
  %v30 = vld [vmem:[%s2 + $0x18] sm:$0xff]
  %v31 = vld [vmem:[%s2 + $0x20] sm:$0xff]
  %v32 = vld [vmem:[%s2 + $0x28] sm:$0xff]
  %v33 = vld [vmem:[%s2 + $0x30] sm:$0xff]
  %v34 = vld [vmem:[%s2 + $0x38] sm:$0xff]
  %v35 = vld [vmem:[%s2 + $0x40] sm:$0xff]
  %v36 = vld [vmem:[%s2 + $0x48] sm:$0xff]
  %v37 = vld [vmem:[%s2 + $0x50] sm:$0xff]
  %v38 = vld [vmem:[%s2 + $0x58] sm:$0xff]
  %v39 = vld [vmem:[%s2 + $0x60] sm:$0xff]
  %v40 = vld [vmem:[%s2 + $0x68] sm:$0xff]
  %v41 = vld [vmem:[%s2 + $0x70] sm:$0xff]
  %v42 = vld [vmem:[%s2 + $0x78] sm:$0xff]
  %43 = vmatprep.subr.mxu0 0.0
  %44 = vmatpush1.msra.mxu0 %v27
  %45 = vmatprep.subr.mxu0 0.0
  %46 = vmatpush1.msra.mxu0 %v28
  %47 = vmatprep.subr.mxu0 0.0
  %48 = vmatpush1.msra.mxu0 %v29
  %49 = vmatprep.subr.mxu0 0.0
  %50 = vmatpush1.msra.mxu0 %v30
  %51 = vmatprep.subr.mxu0 0.0
  %52 = vmatpush1.msra.mxu0 %v31
  %53 = vmatprep.subr.mxu0 0.0
  %54 = vmatpush1.msra.mxu0 %v32
  %55 = vmatprep.subr.mxu0 0.0
  %56 = vmatpush1.msra.mxu0 %v33
  %57 = vmatprep.subr.mxu0 0.0
  %58 = vmatpush1.msra.mxu0 %v34
  %59 = vmatprep.subr.mxu0 0.0
  %60 = vmatpush1.msra.mxu0 %v35
  %61 = vmatprep.subr.mxu0 0.0
  %62 = vmatpush1.msra.mxu0 %v36
  %63 = vmatprep.subr.mxu0 0.0
  %64 = vmatpush1.msra.mxu0 %v37
  %65 = vmatprep.subr.mxu0 0.0
  %66 = vmatpush1.msra.mxu0 %v38
  %67 = vmatprep.subr.mxu0 0.0
  %68 = vmatpush1.msra.mxu0 %v39
  %69 = vmatprep.subr.mxu0 0.0
  %70 = vmatpush1.msra.mxu0 %v40
  %71 = vmatprep.subr.mxu0 0.0
  %72 = vmatpush1.msra.mxu0 %v41
  %73 = vmatprep.subr.mxu0 0.0
  %74 = vmatpush1.msra.mxu0 %v42
  %75 = vmatprep.subr.mxu0 0.0
  %76 = vmatpush1.msra.mxu0 0.0
  %77 = vmatprep.subr.mxu0 0.0
  %78 = vmatpush1.msra.mxu0 0.0
  %79 = vmatprep.subr.mxu0 0.0
  %80 = vmatpush1.msra.mxu0 0.0
  %81 = vmatprep.subr.mxu0 0.0
  %82 = vmatpush1.msra.mxu0 0.0
  %83 = vmatprep.subr.mxu0 0.0
  %84 = vmatpush1.msra.mxu0 0.0
  %85 = vmatprep.subr.mxu0 0.0
  %86 = vmatpush1.msra.mxu0 0.0
  %87 = vmatprep.subr.mxu0 0.0
  %88 = vmatpush1.msra.mxu0 0.0
  %89 = vmatprep.subr.mxu0 0.0
  %90 = vmatpush1.msra.mxu0 0.0
  %91 = vmatprep.subr.mxu0 0.0
  %92 = vmatpush1.msra.mxu0 0.0
  %93 = vmatprep.subr.mxu0 0.0
  %94 = vmatpush1.msra.mxu0 0.0
  %95 = vmatprep.subr.mxu0 0.0
  %96 = vmatpush1.msra.mxu0 0.0
  %97 = vmatprep.subr.mxu0 0.0
  %98 = vmatpush1.msra.mxu0 0.0
  %99 = vmatprep.subr.mxu0 0.0
  %100 = vmatpush1.msra.mxu0 0.0
  %101 = vmatprep.subr.mxu0 0.0
  %102 = vmatpush1.msra.mxu0 0.0
  %103 = vmatprep.subr.mxu0 0.0
  %104 = vmatpush1.msra.mxu0 0.0
  %105 = vmatprep.subr.mxu0 0.0
  %106 = vmatpush1.msra.mxu0 0.0
  %107 = vmatprep.mubr.f32.mxu0 0.0
  %108 = vmatmul.mubr.f32.gmra.mrb[0].mxu0 %v19
  %v109 = vpop.f32.mrb[0].mxu0
  %v110 = vadd.f32 0.0, %v109
  %v111 = vpop.f32.mrb[0].mxu0
  %112 = vdwg.mxu0
  %vm113 = vcmask 189440
  %114 = vst.msk [vmem:[%s3] sm:$0x3] %vm113, %v110
  // Predicated region
  $region14: #{mgd_loss_full_eye.1} parent=0 // pred_check
    _
  $region15: #{mgd_loss_full_eye.1} parent=0 // pred_check_branch
    %116 = sbr.rel (0) target = $region17
  $region16: #{mgd_loss_full_eye.1} parent=0 // pred_region
    _
  $region17: #{mgd_loss_full_eye.1} parent=0 // pred_fallthru
    _
  // Predicated region
  $region18: #{mgd_loss_full_eye.1} parent=0 // pred_check
    _
  $region19: #{mgd_loss_full_eye.1} parent=0 // pred_check_branch
    %118 = sbr.rel (0) target = $region21
  $region20: #{mgd_loss_full_eye.1} parent=0 // pred_region
    _
  $region21: #{mgd_loss_full_eye.1} parent=0 // pred_fallthru
    _
  // Predicated region
  $region22: #{mgd_loss_full_eye.1} parent=0 // pred_check
    _
  $region23: #{mgd_loss_full_eye.1} parent=0 // pred_check_branch
    %120 = sbr.rel (0) target = $region25
  $region24: #{mgd_loss_full_eye.1} parent=0 // pred_region
    _
  $region25: #{mgd_loss_full_eye.1} parent=0 // pred_fallthru
    _
  // Predicated region
  $region26: #{mgd_loss_full_eye.1} parent=0 // pred_check
    _
  $region27: #{mgd_loss_full_eye.1} parent=0 // pred_check_branch
    %122 = sbr.rel (0) target = $region29
  $region28: #{mgd_loss_full_eye.1} parent=0 // pred_region
    _
  $region29: #{mgd_loss_full_eye.1} parent=0 // pred_fallthru
    _

</llo_original>
